<compile_context>
chip_gen: v7x
topology: tpu7x:2x2x1
jax: 0.10.0
libtpu: 0.0.40
codegen_flags: <defaults>
</compile_context>

<pallas_src>
import functools

import jax
import jax.numpy as jnp
from jax import lax
from jax.experimental import pallas as pl
from jax.experimental.pallas import tpu as pltpu


FP = 128                              # padded lane width of the final output / predictor N dim
VMEM_LIMIT_BYTES = 32 * 1024 * 1024   # explicit scoped-VMEM budget (safe on v5e/v6e/v7x)


# ----------------------------- kernel 1: node stage ------------------------------

def _node_stage_kernel(
    xu_ref, xi_ref, aui_ref, aiu_ref,
    w2x_ref, w2h_ref, b2_ref, w3x_ref, w3h_ref, b3_ref,
    w4x_ref, w4h_ref, b4_ref, w5x_ref, w5h_ref, b5_ref,
    tu_ref, ti_ref,
):
    dot = lambda a, b: jnp.dot(a, b, preferred_element_type=jnp.float32)   # bf16 MXU, f32 acc
    bf = lambda x: x.astype(jnp.bfloat16)

    xu = xu_ref[...]        # (Nu, F0) bf16 user features
    xi = xi_ref[...]        # (Ni, F1) bf16 item features
    aui = aui_ref[...]      # (Nu, Ni) bf16 row-normalized adjacency: users <- items ('evaluated')
    aiu = aiu_ref[...]      # (Ni, Nu) bf16 row-normalized adjacency: items <- users ('evaluate')

    # ---- layer k = 0: mean-agg (MXU) + split-weight linear + ReLU (f32 VPU) ----
    hu = bf(dot(aui, xi))                                                  # (Nu, F1)
    hi = bf(dot(aiu, xu))                                                  # (Ni, F0)
    tu = dot(xu, w2x_ref[...]) + dot(hu, w2h_ref[...]) + b2_ref[...]       # (Nu, H0) f32
    ti = dot(xi, w3x_ref[...]) + dot(hi, w3h_ref[...]) + b3_ref[...]       # (Ni, H1) f32
    xu = bf(jnp.maximum(tu, 0.0))
    xi = bf(jnp.maximum(ti, 0.0))

    # ---- layer k = 1: mean-agg + split-weight linear (no ReLU) ----
    hu = bf(dot(aui, xi))                                                  # (Nu, H1)
    hi = bf(dot(aiu, xu))                                                  # (Ni, H0)
    tu_ref[...] = dot(xu, w4x_ref[...]) + dot(hu, w4h_ref[...]) + b4_ref[...]   # (Nu, H0) f32
    ti_ref[...] = dot(xi, w5x_ref[...]) + dot(hi, w5h_ref[...]) + b5_ref[...]   # (Ni, H1) f32


# ----------------------------- kernel 2: edge stage ------------------------------

def _edge_stage_kernel(
    src_ref, dst_ref,                      # scalar-prefetch edge indices (SMEM, int32)
    tu_ref, ti_ref,                        # node features, fully VMEM-resident
    wpu_ref, wpi_ref, bp_ref,              # split predictor weights (K = true widths, N padded to 128)
    o_ref,                                 # (TE, 128) lane-dense output block
    fu_ref, fv_ref,                        # (TE, H0)/(TE, H1) f32 gather scratch
    *, edge_tile, n_classes,
):
    base = pl.program_id(0) * edge_tile

    # Index gather: one dynamic row slice per edge (O(E*H) instead of O(E*N*H) one-hot matmul).
    def gather_row(r, carry):
        s = src_ref[base + r]
        d = dst_ref[base + r]
        fu_ref[pl.ds(r, 1), :] = tu_ref[pl.ds(s, 1), :]
        fv_ref[pl.ds(r, 1), :] = ti_ref[pl.ds(d, 1), :]
        return carry

    lax.fori_loop(0, edge_tile, gather_row, 0, unroll=True)

    # Predictor: concat([f_u, f_v]) @ Wp^T  ==  f_u @ Wpu + f_v @ Wpi  (bf16 MXU, f32 acc).
    fu = fu_ref[...].astype(jnp.bfloat16)
    fv = fv_ref[...].astype(jnp.bfloat16)
    logits = (jnp.dot(fu, wpu_ref[...], preferred_element_type=jnp.float32)
              + jnp.dot(fv, wpi_ref[...], preferred_element_type=jnp.float32)
              + bp_ref[...])                                               # (TE, 128) f32

    # Row softmax over the real classes; padded lanes masked out.  Exact f32 normalization
    # (approx reciprocal previously broke the rows-sum-to-1 property).
    lane = lax.broadcasted_iota(jnp.int32, logits.shape, 1)
    logits = jnp.where(lane < n_classes, logits, -1e30)
    m = jnp.max(logits, axis=1, keepdims=True)
    p = jnp.exp(logits - m)                                                # EUP, f32
    o_ref[...] = p / jnp.sum(p, axis=1, keepdims=True)


# ----------------------------- wrapper ------------------------------

def _full_spec(shape):
    return pl.BlockSpec(shape, lambda i: (0,) * len(shape))


@functools.partial(jax.jit, static_argnames=("n_classes", "edge_tile"))
def graphsage_forward(node_inputs, params, edge_src, edge_dst, n_classes=2, edge_tile=8):
    xu, xi, a_ui, a_iu = node_inputs
    (w2x, w2h, b2, w3x, w3h, b3, w4x, w4h, b4, w5x, w5h, b5, wpu, wpi, bp) = params
    nu = xu.shape[0]
    ni = xi.shape[0]
    h0 = w2x.shape[1]        # user hidden width (true, not padded)
    h1 = w3x.shape[1]        # item hidden width (true, not padded)

    # ---- node stage: single-step kernel, everything resident (tiny at these widths) ----
    node_args = (xu, xi, a_ui, a_iu,
                 w2x, w2h, b2, w3x, w3h, b3, w4x, w4h, b4, w5x, w5h, b5)
    tu, ti = pl.pallas_call(
        _node_stage_kernel,
        out_shape=(jax.ShapeDtypeStruct((nu, h0), jnp.float32),
                   jax.ShapeDtypeStruct((ni, h1), jnp.float32)),
        grid=(1,),
        in_specs=[_full_spec(a.shape) for a in node_args],
        out_specs=(_full_spec((nu, h0)), _full_spec((ni, h1))),
        compiler_params=pltpu.CompilerParams(
            dimension_semantics=("arbitrary",),
            vmem_limit_bytes=VMEM_LIMIT_BYTES),
    )(*node_args)

    # ---- edge stage: tiled over edges, parallel grid (v7x megacore), scalar-prefetch gather ----
    e_real = edge_src.shape[0]
    e_pad = -(-e_real // edge_tile) * edge_tile
    src = jnp.pad(edge_src.astype(jnp.int32), (0, e_pad - e_real))   # pad gathers row 0 (harmless)
    dst = jnp.pad(edge_dst.astype(jnp.int32), (0, e_pad - e_real))

    out = pl.pallas_call(
        functools.partial(_edge_stage_kernel, edge_tile=edge_tile, n_classes=n_classes),
        out_shape=jax.ShapeDtypeStruct((e_pad, FP), jnp.float32),
        grid_spec=pltpu.PrefetchScalarGridSpec(
            num_scalar_prefetch=2,
            grid=(e_pad // edge_tile,),
            in_specs=[
                pl.BlockSpec((nu, h0), lambda e, s, d: (0, 0)),   # tu: resident across tiles
                pl.BlockSpec((ni, h1), lambda e, s, d: (0, 0)),   # ti: resident across tiles
                pl.BlockSpec((h0, FP), lambda e, s, d: (0, 0)),   # Wp user half
                pl.BlockSpec((h1, FP), lambda e, s, d: (0, 0)),   # Wp item half
                pl.BlockSpec((1, FP), lambda e, s, d: (0, 0)),    # bias (lane-padded)
            ],
            out_specs=pl.BlockSpec((edge_tile, FP), lambda e, s, d: (e, 0)),
            scratch_shapes=[pltpu.VMEM((edge_tile, h0), jnp.float32),
                            pltpu.VMEM((edge_tile, h1), jnp.float32)],
        ),
        compiler_params=pltpu.CompilerParams(
            dimension_semantics=("parallel",),
            vmem_limit_bytes=VMEM_LIMIT_BYTES),
    )(src, dst, tu, ti, wpu, wpi, bp)

    return out[:e_real, :n_classes]


# ----------------------------- parameter / input prep ----------------------------

def init_linear(key, in_dim, out_dim):
    # torch.nn.Linear convention: w (out_dim, in_dim), b (out_dim,)
    k1, k2 = jax.random.split(key)
    bound = 1.0 / float(in_dim) ** 0.5
    w = jax.random.uniform(k1, (out_dim, in_dim), jnp.float32, -bound, bound)
    b = jax.random.uniform(k2, (out_dim,), jnp.float32, -bound, bound)
    return w, b


def prepare_params(raw, f0, f1):
    # Linear(cat([X_self, H])) == X_self @ wx + H @ wh + b, weights pre-transposed and split.
    # Conv weights keep their TRUE K/N widths (no 128 padding); MXU operands are bf16.
    def split(w, b, n_self):
        wx = jnp.asarray(w[:, :n_self].T, jnp.bfloat16)
        wh = jnp.asarray(w[:, n_self:].T, jnp.bfloat16)
        bb = jnp.asarray(b.reshape(1, -1), jnp.float32)
        return wx, wh, bb

    w2x, w2h, b2 = split(*raw["conv2"], f0)
    w3x, w3h, b3 = split(*raw["conv3"], f1)
    w4x, w4h, b4 = split(*raw["conv4"], f0)
    w5x, w5h, b5 = split(*raw["conv5"], f1)

    # Predictor: only the class (N / lane) dim is zero-padded to 128 for lane-dense output stores.
    wp, bpv = raw["pred_W"]
    nc = wp.shape[0]
    wpu = jnp.zeros((f0, FP), jnp.bfloat16).at[:, :nc].set(wp[:, :f0].T.astype(jnp.bfloat16))
    wpi = jnp.zeros((f1, FP), jnp.bfloat16).at[:, :nc].set(wp[:, f0:].T.astype(jnp.bfloat16))
    bp = jnp.zeros((1, FP), jnp.float32).at[:, :nc].set(bpv.reshape(1, -1))

    return (w2x, w2h, b2, w3x, w3h, b3, w4x, w4h, b4, w5x, w5h, b5, wpu, wpi, bp)


def prepare_graph_inputs(user_feat, item_feat, adj_iu):
    # Row-normalize adjacency ONCE (mean over incoming messages; isolated nodes -> 0),
    # so in-kernel mean aggregation is a plain MXU matmul.  MXU operands cast to bf16.
    a_iu = adj_iu / jnp.maximum(adj_iu.sum(axis=1, keepdims=True), 1.0)
    adj_ui = adj_iu.T
    a_ui = adj_ui / jnp.maximum(adj_ui.sum(axis=1, keepdims=True), 1.0)
    return (user_feat.astype(jnp.bfloat16), item_feat.astype(jnp.bfloat16),
            a_ui.astype(jnp.bfloat16), a_iu.astype(jnp.bfloat16))


# ----------------------------- pure-JAX reference (for checking) -----------------

def reference_forward(raw, user_feat, item_feat, adj_iu, edge_src, edge_dst):
    adj_ui = adj_iu.T

    def mean_agg(a, x):
        return (a @ x) / jnp.maximum(a.sum(axis=1, keepdims=True), 1.0)

    feats = {"user": user_feat, "item": item_feat}
    for k in range(2):
        h_user = mean_agg(adj_ui, feats["item"])
        h_item = mean_agg(adj_iu, feats["user"])
        cat_u = jnp.concatenate([feats["user"], h_user], axis=1)
        cat_i = jnp.concatenate([feats["item"], h_item], axis=1)
        if k == 0:
            wu, bu = raw["conv2"]; wi, bi = raw["conv3"]
            feats = {"user": jnp.maximum(cat_u @ wu.T + bu, 0.0),
                     "item": jnp.maximum(cat_i @ wi.T + bi, 0.0)}
        else:
            wu, bu = raw["conv4"]; wi, bi = raw["conv5"]
            feats = {"user": cat_u @ wu.T + bu, "item": cat_i @ wi.T + bi}

    fu = feats["user"][edge_src]
    fv = feats["item"][edge_dst]
    wp, bp = raw["pred_W"]
    logits = jnp.concatenate([fu, fv], axis=1) @ wp.T + bp
    return jax.nn.softmax(logits, axis=1)


# ------------------------------------- main ---------------------------------------

if __name__ == "__main__":
    h_feats_0, h_feats_1 = 32, 16        # user / item hidden (and input feature) widths
    num_users, num_items, num_edges = 8, 16, 22

    keys = jax.random.split(jax.random.PRNGKey(0), 9)
    user_feat = jax.random.normal(keys[0], (num_users, h_feats_0), jnp.float32)
    item_feat = jax.random.normal(keys[1], (num_items, h_feats_1), jnp.float32)
    edge_src = jax.random.randint(keys[2], (num_edges,), 0, num_users)   # user endpoint
    edge_dst = jax.random.randint(keys[3], (num_edges,), 0, num_items)   # item endpoint

    # Dense edge-count adjacency (handles multi-edges like DGL's message counts).
    adj_iu = jnp.zeros((num_items, num_users), jnp.float32).at[edge_dst, edge_src].add(1.0)

    raw_params = {
        "conv2": init_linear(keys[4], h_feats_0 + h_feats_1, h_feats_0),
        "conv3": init_linear(keys[5], h_feats_0 + h_feats_1, h_feats_1),
        "conv4": init_linear(keys[6], h_feats_0 + h_feats_1, h_feats_0),
        "conv5": init_linear(keys[7], h_feats_0 + h_feats_1, h_feats_1),
        "pred_W": init_linear(keys[8], h_feats_0 + h_feats_1, 2),
    }

    node_inputs = prepare_graph_inputs(user_feat, item_feat, adj_iu)
    params = prepare_params(raw_params, h_feats_0, h_feats_1)

    out = graphsage_forward(node_inputs, params, edge_src, edge_dst, n_classes=2, edge_tile=8)
    out = jax.block_until_ready(out)

    ref = reference_forward(raw_params, user_feat, item_feat, adj_iu, edge_src, edge_dst)

    assert out.shape == (num_edges, 2)
    # Exact f32 softmax normalization -> rows sum to 1 tightly.
    assert bool(jnp.allclose(jnp.sum(out, axis=1), 1.0, atol=1e-5))
    # bf16 MXU operands vs the f32 reference: probabilities agree to well under 2e-2.
    assert bool(jnp.allclose(out, ref, atol=2e-2))
    print("KERNEL_OK")
</pallas_src>

<mosaic_0001>
module attributes {stable_mosaic.version = 11 : i64} {
  func.func @_node_stage_kernel(%arg0: i32, %arg1: memref<8x32xbf16, #tpu.memory_space<vmem>>, %arg2: memref<16x16xbf16, #tpu.memory_space<vmem>>, %arg3: memref<8x16xbf16, #tpu.memory_space<vmem>>, %arg4: memref<16x8xbf16, #tpu.memory_space<vmem>>, %arg5: memref<32x32xbf16, #tpu.memory_space<vmem>>, %arg6: memref<16x32xbf16, #tpu.memory_space<vmem>>, %arg7: memref<1x32xf32, #tpu.memory_space<vmem>>, %arg8: memref<16x16xbf16, #tpu.memory_space<vmem>>, %arg9: memref<32x16xbf16, #tpu.memory_space<vmem>>, %arg10: memref<1x16xf32, #tpu.memory_space<vmem>>, %arg11: memref<32x32xbf16, #tpu.memory_space<vmem>>, %arg12: memref<16x32xbf16, #tpu.memory_space<vmem>>, %arg13: memref<1x32xf32, #tpu.memory_space<vmem>>, %arg14: memref<16x16xbf16, #tpu.memory_space<vmem>>, %arg15: memref<32x16xbf16, #tpu.memory_space<vmem>>, %arg16: memref<1x16xf32, #tpu.memory_space<vmem>>, %arg17: memref<8x32xf32, #tpu.memory_space<vmem>>, %arg18: memref<16x16xf32, #tpu.memory_space<vmem>>) attributes {dimension_semantics = [#tpu.dimension_semantics<arbitrary>], iteration_bounds = array<i64: 1>, scalar_prefetch = 0 : i64, scratch_operands = 0 : i64, tpu.core_type = #tpu.core_type<tc>, window_params = [{pipeline_mode = #tpu.pipeline_mode<synchronous>, transform_indices = @transform_0, window_bounds = array<i64: 8, 32>}, {pipeline_mode = #tpu.pipeline_mode<synchronous>, transform_indices = @transform_1, window_bounds = array<i64: 16, 16>}, {pipeline_mode = #tpu.pipeline_mode<synchronous>, transform_indices = @transform_2, window_bounds = array<i64: 8, 16>}, {pipeline_mode = #tpu.pipeline_mode<synchronous>, transform_indices = @transform_3, window_bounds = array<i64: 16, 8>}, {pipeline_mode = #tpu.pipeline_mode<synchronous>, transform_indices = @transform_4, window_bounds = array<i64: 32, 32>}, {pipeline_mode = #tpu.pipeline_mode<synchronous>, transform_indices = @transform_5, window_bounds = array<i64: 16, 32>}, {pipeline_mode = #tpu.pipeline_mode<synchronous>, transform_indices = @transform_6, window_bounds = array<i64: 1, 32>}, {pipeline_mode = #tpu.pipeline_mode<synchronous>, transform_indices = @transform_7, window_bounds = array<i64: 16, 16>}, {pipeline_mode = #tpu.pipeline_mode<synchronous>, transform_indices = @transform_8, window_bounds = array<i64: 32, 16>}, {pipeline_mode = #tpu.pipeline_mode<synchronous>, transform_indices = @transform_9, window_bounds = array<i64: 1, 16>}, {pipeline_mode = #tpu.pipeline_mode<synchronous>, transform_indices = @transform_10, window_bounds = array<i64: 32, 32>}, {pipeline_mode = #tpu.pipeline_mode<synchronous>, transform_indices = @transform_11, window_bounds = array<i64: 16, 32>}, {pipeline_mode = #tpu.pipeline_mode<synchronous>, transform_indices = @transform_12, window_bounds = array<i64: 1, 32>}, {pipeline_mode = #tpu.pipeline_mode<synchronous>, transform_indices = @transform_13, window_bounds = array<i64: 16, 16>}, {pipeline_mode = #tpu.pipeline_mode<synchronous>, transform_indices = @transform_14, window_bounds = array<i64: 32, 16>}, {pipeline_mode = #tpu.pipeline_mode<synchronous>, transform_indices = @transform_15, window_bounds = array<i64: 1, 16>}, {pipeline_mode = #tpu.pipeline_mode<synchronous>, transform_indices = @transform_16, window_bounds = array<i64: 8, 32>}, {pipeline_mode = #tpu.pipeline_mode<synchronous>, transform_indices = @transform_17, window_bounds = array<i64: 16, 16>}]} {
    %c0 = arith.constant 0 : index
    %c0_0 = arith.constant 0 : index
    %0 = vector.load %arg1[%c0, %c0_0] : memref<8x32xbf16, #tpu.memory_space<vmem>>, vector<8x32xbf16>
    %c0_1 = arith.constant 0 : index
    %c0_2 = arith.constant 0 : index
    %1 = vector.load %arg2[%c0_1, %c0_2] : memref<16x16xbf16, #tpu.memory_space<vmem>>, vector<16x16xbf16>
    %c0_3 = arith.constant 0 : index
    %c0_4 = arith.constant 0 : index
    %2 = vector.load %arg3[%c0_3, %c0_4] : memref<8x16xbf16, #tpu.memory_space<vmem>>, vector<8x16xbf16>
    %c0_5 = arith.constant 0 : index
    %c0_6 = arith.constant 0 : index
    %3 = vector.load %arg4[%c0_5, %c0_6] : memref<16x8xbf16, #tpu.memory_space<vmem>>, vector<16x8xbf16>
    %cst = arith.constant dense<0.000000e+00> : vector<8x16xf32>
    %4 = tpu.matmul %2, %1, %cst {dimension_numbers = #tpu.dot_dimension_numbers<[1], [0], [0], [1], [0, 0, 1, 1], [], []>} : vector<8x16xbf16>, vector<16x16xbf16>, vector<8x16xf32> -> vector<8x16xf32>
    %5 = arith.truncf %4 : vector<8x16xf32> to vector<8x16xbf16>
    %cst_7 = arith.constant dense<0.000000e+00> : vector<16x32xf32>
    %6 = tpu.matmul %3, %0, %cst_7 {dimension_numbers = #tpu.dot_dimension_numbers<[1], [0], [0], [1], [0, 0, 1, 1], [], []>} : vector<16x8xbf16>, vector<8x32xbf16>, vector<16x32xf32> -> vector<16x32xf32>
    %7 = arith.truncf %6 : vector<16x32xf32> to vector<16x32xbf16>
    %c0_8 = arith.constant 0 : index
    %c0_9 = arith.constant 0 : index
    %8 = vector.load %arg5[%c0_8, %c0_9] : memref<32x32xbf16, #tpu.memory_space<vmem>>, vector<32x32xbf16>
    %cst_10 = arith.constant dense<0.000000e+00> : vector<8x32xf32>
    %9 = tpu.matmul %0, %8, %cst_10 {dimension_numbers = #tpu.dot_dimension_numbers<[1], [0], [0], [1], [0, 0, 1, 1], [], []>} : vector<8x32xbf16>, vector<32x32xbf16>, vector<8x32xf32> -> vector<8x32xf32>
    %c0_11 = arith.constant 0 : index
    %c0_12 = arith.constant 0 : index
    %10 = vector.load %arg6[%c0_11, %c0_12] : memref<16x32xbf16, #tpu.memory_space<vmem>>, vector<16x32xbf16>
    %cst_13 = arith.constant dense<0.000000e+00> : vector<8x32xf32>
    %11 = tpu.matmul %5, %10, %cst_13 {dimension_numbers = #tpu.dot_dimension_numbers<[1], [0], [0], [1], [0, 0, 1, 1], [], []>} : vector<8x16xbf16>, vector<16x32xbf16>, vector<8x32xf32> -> vector<8x32xf32>
    %12 = arith.addf %9, %11 : vector<8x32xf32>
    %c0_14 = arith.constant 0 : index
    %c0_15 = arith.constant 0 : index
    %13 = vector.load %arg7[%c0_14, %c0_15] : memref<1x32xf32, #tpu.memory_space<vmem>>, vector<1x32xf32>
    %14 = vector.broadcast %13 : vector<1x32xf32> to vector<8x32xf32>
    %15 = arith.addf %12, %14 : vector<8x32xf32>
    %c0_16 = arith.constant 0 : index
    %c0_17 = arith.constant 0 : index
    %16 = vector.load %arg8[%c0_16, %c0_17] : memref<16x16xbf16, #tpu.memory_space<vmem>>, vector<16x16xbf16>
    %cst_18 = arith.constant dense<0.000000e+00> : vector<16x16xf32>
    %17 = tpu.matmul %1, %16, %cst_18 {dimension_numbers = #tpu.dot_dimension_numbers<[1], [0], [0], [1], [0, 0, 1, 1], [], []>} : vector<16x16xbf16>, vector<16x16xbf16>, vector<16x16xf32> -> vector<16x16xf32>
    %c0_19 = arith.constant 0 : index
    %c0_20 = arith.constant 0 : index
    %18 = vector.load %arg9[%c0_19, %c0_20] : memref<32x16xbf16, #tpu.memory_space<vmem>>, vector<32x16xbf16>
    %cst_21 = arith.constant dense<0.000000e+00> : vector<16x16xf32>
    %19 = tpu.matmul %7, %18, %cst_21 {dimension_numbers = #tpu.dot_dimension_numbers<[1], [0], [0], [1], [0, 0, 1, 1], [], []>} : vector<16x32xbf16>, vector<32x16xbf16>, vector<16x16xf32> -> vector<16x16xf32>
    %20 = arith.addf %17, %19 : vector<16x16xf32>
    %c0_22 = arith.constant 0 : index
    %c0_23 = arith.constant 0 : index
    %21 = vector.load %arg10[%c0_22, %c0_23] : memref<1x16xf32, #tpu.memory_space<vmem>>, vector<1x16xf32>
    %22 = vector.broadcast %21 : vector<1x16xf32> to vector<16x16xf32>
    %23 = arith.addf %20, %22 : vector<16x16xf32>
    %cst_24 = arith.constant 0.000000e+00 : f32
    %24 = vector.broadcast %cst_24 : f32 to vector<8x32xf32>
    %25 = arith.maximumf %15, %24 : vector<8x32xf32>
    %26 = arith.truncf %25 : vector<8x32xf32> to vector<8x32xbf16>
    %cst_25 = arith.constant 0.000000e+00 : f32
    %27 = vector.broadcast %cst_25 : f32 to vector<16x16xf32>
    %28 = arith.maximumf %23, %27 : vector<16x16xf32>
    %29 = arith.truncf %28 : vector<16x16xf32> to vector<16x16xbf16>
    %cst_26 = arith.constant dense<0.000000e+00> : vector<8x16xf32>
    %30 = tpu.matmul %2, %29, %cst_26 {dimension_numbers = #tpu.dot_dimension_numbers<[1], [0], [0], [1], [0, 0, 1, 1], [], []>} : vector<8x16xbf16>, vector<16x16xbf16>, vector<8x16xf32> -> vector<8x16xf32>
    %31 = arith.truncf %30 : vector<8x16xf32> to vector<8x16xbf16>
    %cst_27 = arith.constant dense<0.000000e+00> : vector<16x32xf32>
    %32 = tpu.matmul %3, %26, %cst_27 {dimension_numbers = #tpu.dot_dimension_numbers<[1], [0], [0], [1], [0, 0, 1, 1], [], []>} : vector<16x8xbf16>, vector<8x32xbf16>, vector<16x32xf32> -> vector<16x32xf32>
    %33 = arith.truncf %32 : vector<16x32xf32> to vector<16x32xbf16>
    %c0_28 = arith.constant 0 : index
    %c0_29 = arith.constant 0 : index
    %34 = vector.load %arg11[%c0_28, %c0_29] : memref<32x32xbf16, #tpu.memory_space<vmem>>, vector<32x32xbf16>
    %cst_30 = arith.constant dense<0.000000e+00> : vector<8x32xf32>
    %35 = tpu.matmul %26, %34, %cst_30 {dimension_numbers = #tpu.dot_dimension_numbers<[1], [0], [0], [1], [0, 0, 1, 1], [], []>} : vector<8x32xbf16>, vector<32x32xbf16>, vector<8x32xf32> -> vector<8x32xf32>
    %c0_31 = arith.constant 0 : index
    %c0_32 = arith.constant 0 : index
    %36 = vector.load %arg12[%c0_31, %c0_32] : memref<16x32xbf16, #tpu.memory_space<vmem>>, vector<16x32xbf16>
    %cst_33 = arith.constant dense<0.000000e+00> : vector<8x32xf32>
    %37 = tpu.matmul %31, %36, %cst_33 {dimension_numbers = #tpu.dot_dimension_numbers<[1], [0], [0], [1], [0, 0, 1, 1], [], []>} : vector<8x16xbf16>, vector<16x32xbf16>, vector<8x32xf32> -> vector<8x32xf32>
    %38 = arith.addf %35, %37 : vector<8x32xf32>
    %c0_34 = arith.constant 0 : index
    %c0_35 = arith.constant 0 : index
    %39 = vector.load %arg13[%c0_34, %c0_35] : memref<1x32xf32, #tpu.memory_space<vmem>>, vector<1x32xf32>
    %40 = vector.broadcast %39 : vector<1x32xf32> to vector<8x32xf32>
    %41 = arith.addf %38, %40 : vector<8x32xf32>
    %c0_36 = arith.constant 0 : index
    %c0_37 = arith.constant 0 : index
    %42 = vector.load %arg17[%c0_36, %c0_37] : memref<8x32xf32, #tpu.memory_space<vmem>>, vector<8x32xf32>
    tpu.vector_store %arg17[%c0_36, %c0_37], %41 {strides = array<i32>} : memref<8x32xf32, #tpu.memory_space<vmem>>, vector<8x32xf32>,
    %c0_38 = arith.constant 0 : index
    %c0_39 = arith.constant 0 : index
    %43 = vector.load %arg14[%c0_38, %c0_39] : memref<16x16xbf16, #tpu.memory_space<vmem>>, vector<16x16xbf16>
    %cst_40 = arith.constant dense<0.000000e+00> : vector<16x16xf32>
    %44 = tpu.matmul %29, %43, %cst_40 {dimension_numbers = #tpu.dot_dimension_numbers<[1], [0], [0], [1], [0, 0, 1, 1], [], []>} : vector<16x16xbf16>, vector<16x16xbf16>, vector<16x16xf32> -> vector<16x16xf32>
    %c0_41 = arith.constant 0 : index
    %c0_42 = arith.constant 0 : index
    %45 = vector.load %arg15[%c0_41, %c0_42] : memref<32x16xbf16, #tpu.memory_space<vmem>>, vector<32x16xbf16>
    %cst_43 = arith.constant dense<0.000000e+00> : vector<16x16xf32>
    %46 = tpu.matmul %33, %45, %cst_43 {dimension_numbers = #tpu.dot_dimension_numbers<[1], [0], [0], [1], [0, 0, 1, 1], [], []>} : vector<16x32xbf16>, vector<32x16xbf16>, vector<16x16xf32> -> vector<16x16xf32>
    %47 = arith.addf %44, %46 : vector<16x16xf32>
    %c0_44 = arith.constant 0 : index
    %c0_45 = arith.constant 0 : index
    %48 = vector.load %arg16[%c0_44, %c0_45] : memref<1x16xf32, #tpu.memory_space<vmem>>, vector<1x16xf32>
    %49 = vector.broadcast %48 : vector<1x16xf32> to vector<16x16xf32>
    %50 = arith.addf %47, %49 : vector<16x16xf32>
    %c0_46 = arith.constant 0 : index
    %c0_47 = arith.constant 0 : index
    %51 = vector.load %arg18[%c0_46, %c0_47] : memref<16x16xf32, #tpu.memory_space<vmem>>, vector<16x16xf32>
    tpu.vector_store %arg18[%c0_46, %c0_47], %50 {strides = array<i32>} : memref<16x16xf32, #tpu.memory_space<vmem>>, vector<16x16xf32>,
    return
  }
  func.func @transform_0(%arg0: i32) -> (i32, i32) {
    %c0_i32 = arith.constant 0 : i32
    %c0_i32_0 = arith.constant 0 : i32
    %c0_i32_1 = arith.constant 0 : i32
    return %c0_i32, %c0_i32_0 : i32, i32
  }
  func.func @transform_1(%arg0: i32) -> (i32, i32) {
    %c0_i32 = arith.constant 0 : i32
    %c0_i32_0 = arith.constant 0 : i32
    %c0_i32_1 = arith.constant 0 : i32
    return %c0_i32, %c0_i32_0 : i32, i32
  }
  func.func @transform_2(%arg0: i32) -> (i32, i32) {
    %c0_i32 = arith.constant 0 : i32
    %c0_i32_0 = arith.constant 0 : i32
    %c0_i32_1 = arith.constant 0 : i32
    return %c0_i32, %c0_i32_0 : i32, i32
  }
  func.func @transform_3(%arg0: i32) -> (i32, i32) {
    %c0_i32 = arith.constant 0 : i32
    %c0_i32_0 = arith.constant 0 : i32
    %c0_i32_1 = arith.constant 0 : i32
    return %c0_i32, %c0_i32_0 : i32, i32
  }
  func.func @transform_4(%arg0: i32) -> (i32, i32) {
    %c0_i32 = arith.constant 0 : i32
    %c0_i32_0 = arith.constant 0 : i32
    %c0_i32_1 = arith.constant 0 : i32
    return %c0_i32, %c0_i32_0 : i32, i32
  }
  func.func @transform_5(%arg0: i32) -> (i32, i32) {
    %c0_i32 = arith.constant 0 : i32
    %c0_i32_0 = arith.constant 0 : i32
    %c0_i32_1 = arith.constant 0 : i32
    return %c0_i32, %c0_i32_0 : i32, i32
  }
  func.func @transform_6(%arg0: i32) -> (i32, i32) {
    %c0_i32 = arith.constant 0 : i32
    %c0_i32_0 = arith.constant 0 : i32
    %c0_i32_1 = arith.constant 0 : i32
    return %c0_i32, %c0_i32_0 : i32, i32
  }
  func.func @transform_7(%arg0: i32) -> (i32, i32) {
    %c0_i32 = arith.constant 0 : i32
    %c0_i32_0 = arith.constant 0 : i32
    %c0_i32_1 = arith.constant 0 : i32
    return %c0_i32, %c0_i32_0 : i32, i32
  }
  func.func @transform_8(%arg0: i32) -> (i32, i32) {
    %c0_i32 = arith.constant 0 : i32
    %c0_i32_0 = arith.constant 0 : i32
    %c0_i32_1 = arith.constant 0 : i32
    return %c0_i32, %c0_i32_0 : i32, i32
  }
  func.func @transform_9(%arg0: i32) -> (i32, i32) {
    %c0_i32 = arith.constant 0 : i32
    %c0_i32_0 = arith.constant 0 : i32
    %c0_i32_1 = arith.constant 0 : i32
    return %c0_i32, %c0_i32_0 : i32, i32
  }
  func.func @transform_10(%arg0: i32) -> (i32, i32) {
    %c0_i32 = arith.constant 0 : i32
    %c0_i32_0 = arith.constant 0 : i32
    %c0_i32_1 = arith.constant 0 : i32
    return %c0_i32, %c0_i32_0 : i32, i32
  }
  func.func @transform_11(%arg0: i32) -> (i32, i32) {
    %c0_i32 = arith.constant 0 : i32
    %c0_i32_0 = arith.constant 0 : i32
    %c0_i32_1 = arith.constant 0 : i32
    return %c0_i32, %c0_i32_0 : i32, i32
  }
  func.func @transform_12(%arg0: i32) -> (i32, i32) {
    %c0_i32 = arith.constant 0 : i32
    %c0_i32_0 = arith.constant 0 : i32
    %c0_i32_1 = arith.constant 0 : i32
    return %c0_i32, %c0_i32_0 : i32, i32
  }
  func.func @transform_13(%arg0: i32) -> (i32, i32) {
    %c0_i32 = arith.constant 0 : i32
    %c0_i32_0 = arith.constant 0 : i32
    %c0_i32_1 = arith.constant 0 : i32
    return %c0_i32, %c0_i32_0 : i32, i32
  }
  func.func @transform_14(%arg0: i32) -> (i32, i32) {
    %c0_i32 = arith.constant 0 : i32
    %c0_i32_0 = arith.constant 0 : i32
    %c0_i32_1 = arith.constant 0 : i32
    return %c0_i32, %c0_i32_0 : i32, i32
  }
  func.func @transform_15(%arg0: i32) -> (i32, i32) {
    %c0_i32 = arith.constant 0 : i32
    %c0_i32_0 = arith.constant 0 : i32
    %c0_i32_1 = arith.constant 0 : i32
    return %c0_i32, %c0_i32_0 : i32, i32
  }
  func.func @transform_16(%arg0: i32) -> (i32, i32) {
    %c0_i32 = arith.constant 0 : i32
    %c0_i32_0 = arith.constant 0 : i32
    %c0_i32_1 = arith.constant 0 : i32
    return %c0_i32, %c0_i32_0 : i32, i32
  }
  func.func @transform_17(%arg0: i32) -> (i32, i32) {
    %c0_i32 = arith.constant 0 : i32
    %c0_i32_0 = arith.constant 0 : i32
    %c0_i32_1 = arith.constant 0 : i32
    return %c0_i32, %c0_i32_0 : i32, i32
  }
}

module attributes {stable_mosaic.version = 11 : i64} {
  func.func @_edge_stage_kernel(%arg0: i32, %arg1: memref<24xi32, #tpu.memory_space<smem>>, %arg2: memref<24xi32, #tpu.memory_space<smem>>, %arg3: memref<8x32xf32, #tpu.memory_space<vmem>>, %arg4: memref<16x16xf32, #tpu.memory_space<vmem>>, %arg5: memref<32x128xbf16, #tpu.memory_space<vmem>>, %arg6: memref<16x128xbf16, #tpu.memory_space<vmem>>, %arg7: memref<1x128xf32, #tpu.memory_space<vmem>>, %arg8: memref<8x128xf32, #tpu.memory_space<vmem>>, %arg9: memref<8x32xf32, #tpu.memory_space<vmem>>, %arg10: memref<8x16xf32, #tpu.memory_space<vmem>>) attributes {dimension_semantics = [#tpu.dimension_semantics<parallel>], iteration_bounds = array<i64: 3>, scalar_prefetch = 2 : i64, scratch_operands = 2 : i64, tpu.core_type = #tpu.core_type<tc>, window_params = [{pipeline_mode = #tpu.pipeline_mode<synchronous>, transform_indices = @transform_0, window_bounds = array<i64: 8, 32>}, {pipeline_mode = #tpu.pipeline_mode<synchronous>, transform_indices = @transform_1, window_bounds = array<i64: 16, 16>}, {pipeline_mode = #tpu.pipeline_mode<synchronous>, transform_indices = @transform_2, window_bounds = array<i64: 32, 128>}, {pipeline_mode = #tpu.pipeline_mode<synchronous>, transform_indices = @transform_3, window_bounds = array<i64: 16, 128>}, {pipeline_mode = #tpu.pipeline_mode<synchronous>, transform_indices = @transform_4, window_bounds = array<i64: 1, 128>}, {transform_indices = @transform_5, window_bounds = array<i64: 8, 128>}]} {
    %c8_i32 = arith.constant 8 : i32
    %0 = arith.muli %arg0, %c8_i32 : i32
    %c0_i32 = arith.constant 0 : i32
    %1 = arith.addi %0, %c0_i32 : i32
    %2 = arith.index_cast %1 : i32 to index
    %3 = memref.load %arg1[%2] : memref<24xi32, #tpu.memory_space<smem>>
    %4 = arith.addi %0, %c0_i32 : i32
    %5 = arith.index_cast %4 : i32 to index
    %6 = memref.load %arg2[%5] : memref<24xi32, #tpu.memory_space<smem>>
    %7 = arith.index_cast %3 : i32 to index
    %c0 = arith.constant 0 : index
    %8 = vector.load %arg3[%7, %c0] : memref<8x32xf32, #tpu.memory_space<vmem>>, vector<1x32xf32>
    %9 = arith.index_cast %c0_i32 : i32 to index
    %c0_0 = arith.constant 0 : index
    %10 = vector.load %arg9[%9, %c0_0] : memref<8x32xf32, #tpu.memory_space<vmem>>, vector<1x32xf32>
    tpu.vector_store %arg9[%9, %c0_0], %8 {strides = array<i32>} : memref<8x32xf32, #tpu.memory_space<vmem>>, vector<1x32xf32>,
    %11 = arith.index_cast %6 : i32 to index
    %c0_1 = arith.constant 0 : index
    %12 = vector.load %arg4[%11, %c0_1] : memref<16x16xf32, #tpu.memory_space<vmem>>, vector<1x16xf32>
    %13 = arith.index_cast %c0_i32 : i32 to index
    %c0_2 = arith.constant 0 : index
    %14 = vector.load %arg10[%13, %c0_2] : memref<8x16xf32, #tpu.memory_space<vmem>>, vector<1x16xf32>
    tpu.vector_store %arg10[%13, %c0_2], %12 {strides = array<i32>} : memref<8x16xf32, #tpu.memory_space<vmem>>, vector<1x16xf32>,
    %c1_i32 = arith.constant 1 : i32
    %15 = arith.addi %0, %c1_i32 : i32
    %16 = arith.index_cast %15 : i32 to index
    %17 = memref.load %arg1[%16] : memref<24xi32, #tpu.memory_space<smem>>
    %18 = arith.addi %0, %c1_i32 : i32
    %19 = arith.index_cast %18 : i32 to index
    %20 = memref.load %arg2[%19] : memref<24xi32, #tpu.memory_space<smem>>
    %21 = arith.index_cast %17 : i32 to index
    %c0_3 = arith.constant 0 : index
    %22 = vector.load %arg3[%21, %c0_3] : memref<8x32xf32, #tpu.memory_space<vmem>>, vector<1x32xf32>
    %23 = arith.index_cast %c1_i32 : i32 to index
    %c0_4 = arith.constant 0 : index
    %24 = vector.load %arg9[%23, %c0_4] : memref<8x32xf32, #tpu.memory_space<vmem>>, vector<1x32xf32>
    tpu.vector_store %arg9[%23, %c0_4], %22 {strides = array<i32>} : memref<8x32xf32, #tpu.memory_space<vmem>>, vector<1x32xf32>,
    %25 = arith.index_cast %20 : i32 to index
    %c0_5 = arith.constant 0 : index
    %26 = vector.load %arg4[%25, %c0_5] : memref<16x16xf32, #tpu.memory_space<vmem>>, vector<1x16xf32>
    %27 = arith.index_cast %c1_i32 : i32 to index
    %c0_6 = arith.constant 0 : index
    %28 = vector.load %arg10[%27, %c0_6] : memref<8x16xf32, #tpu.memory_space<vmem>>, vector<1x16xf32>
    tpu.vector_store %arg10[%27, %c0_6], %26 {strides = array<i32>} : memref<8x16xf32, #tpu.memory_space<vmem>>, vector<1x16xf32>,
    %c2_i32 = arith.constant 2 : i32
    %29 = arith.addi %0, %c2_i32 : i32
    %30 = arith.index_cast %29 : i32 to index
    %31 = memref.load %arg1[%30] : memref<24xi32, #tpu.memory_space<smem>>
    %32 = arith.addi %0, %c2_i32 : i32
    %33 = arith.index_cast %32 : i32 to index
    %34 = memref.load %arg2[%33] : memref<24xi32, #tpu.memory_space<smem>>
    %35 = arith.index_cast %31 : i32 to index
    %c0_7 = arith.constant 0 : index
    %36 = vector.load %arg3[%35, %c0_7] : memref<8x32xf32, #tpu.memory_space<vmem>>, vector<1x32xf32>
    %37 = arith.index_cast %c2_i32 : i32 to index
    %c0_8 = arith.constant 0 : index
    %38 = vector.load %arg9[%37, %c0_8] : memref<8x32xf32, #tpu.memory_space<vmem>>, vector<1x32xf32>
    tpu.vector_store %arg9[%37, %c0_8], %36 {strides = array<i32>} : memref<8x32xf32, #tpu.memory_space<vmem>>, vector<1x32xf32>,
    %39 = arith.index_cast %34 : i32 to index
    %c0_9 = arith.constant 0 : index
    %40 = vector.load %arg4[%39, %c0_9] : memref<16x16xf32, #tpu.memory_space<vmem>>, vector<1x16xf32>
    %41 = arith.index_cast %c2_i32 : i32 to index
    %c0_10 = arith.constant 0 : index
    %42 = vector.load %arg10[%41, %c0_10] : memref<8x16xf32, #tpu.memory_space<vmem>>, vector<1x16xf32>
    tpu.vector_store %arg10[%41, %c0_10], %40 {strides = array<i32>} : memref<8x16xf32, #tpu.memory_space<vmem>>, vector<1x16xf32>,
    %c3_i32 = arith.constant 3 : i32
    %43 = arith.addi %0, %c3_i32 : i32
    %44 = arith.index_cast %43 : i32 to index
    %45 = memref.load %arg1[%44] : memref<24xi32, #tpu.memory_space<smem>>
    %46 = arith.addi %0, %c3_i32 : i32
    %47 = arith.index_cast %46 : i32 to index
    %48 = memref.load %arg2[%47] : memref<24xi32, #tpu.memory_space<smem>>
    %49 = arith.index_cast %45 : i32 to index
    %c0_11 = arith.constant 0 : index
    %50 = vector.load %arg3[%49, %c0_11] : memref<8x32xf32, #tpu.memory_space<vmem>>, vector<1x32xf32>
    %51 = arith.index_cast %c3_i32 : i32 to index
    %c0_12 = arith.constant 0 : index
    %52 = vector.load %arg9[%51, %c0_12] : memref<8x32xf32, #tpu.memory_space<vmem>>, vector<1x32xf32>
    tpu.vector_store %arg9[%51, %c0_12], %50 {strides = array<i32>} : memref<8x32xf32, #tpu.memory_space<vmem>>, vector<1x32xf32>,
    %53 = arith.index_cast %48 : i32 to index
    %c0_13 = arith.constant 0 : index
    %54 = vector.load %arg4[%53, %c0_13] : memref<16x16xf32, #tpu.memory_space<vmem>>, vector<1x16xf32>
    %55 = arith.index_cast %c3_i32 : i32 to index
    %c0_14 = arith.constant 0 : index
    %56 = vector.load %arg10[%55, %c0_14] : memref<8x16xf32, #tpu.memory_space<vmem>>, vector<1x16xf32>
    tpu.vector_store %arg10[%55, %c0_14], %54 {strides = array<i32>} : memref<8x16xf32, #tpu.memory_space<vmem>>, vector<1x16xf32>,
    %c4_i32 = arith.constant 4 : i32
    %57 = arith.addi %0, %c4_i32 : i32
    %58 = arith.index_cast %57 : i32 to index
    %59 = memref.load %arg1[%58] : memref<24xi32, #tpu.memory_space<smem>>
    %60 = arith.addi %0, %c4_i32 : i32
    %61 = arith.index_cast %60 : i32 to index
    %62 = memref.load %arg2[%61] : memref<24xi32, #tpu.memory_space<smem>>
    %63 = arith.index_cast %59 : i32 to index
    %c0_15 = arith.constant 0 : index
    %64 = vector.load %arg3[%63, %c0_15] : memref<8x32xf32, #tpu.memory_space<vmem>>, vector<1x32xf32>
    %65 = arith.index_cast %c4_i32 : i32 to index
    %c0_16 = arith.constant 0 : index
    %66 = vector.load %arg9[%65, %c0_16] : memref<8x32xf32, #tpu.memory_space<vmem>>, vector<1x32xf32>
    tpu.vector_store %arg9[%65, %c0_16], %64 {strides = array<i32>} : memref<8x32xf32, #tpu.memory_space<vmem>>, vector<1x32xf32>,
    %67 = arith.index_cast %62 : i32 to index
    %c0_17 = arith.constant 0 : index
    %68 = vector.load %arg4[%67, %c0_17] : memref<16x16xf32, #tpu.memory_space<vmem>>, vector<1x16xf32>
    %69 = arith.index_cast %c4_i32 : i32 to index
    %c0_18 = arith.constant 0 : index
    %70 = vector.load %arg10[%69, %c0_18] : memref<8x16xf32, #tpu.memory_space<vmem>>, vector<1x16xf32>
    tpu.vector_store %arg10[%69, %c0_18], %68 {strides = array<i32>} : memref<8x16xf32, #tpu.memory_space<vmem>>, vector<1x16xf32>,
    %c5_i32 = arith.constant 5 : i32
    %71 = arith.addi %0, %c5_i32 : i32
    %72 = arith.index_cast %71 : i32 to index
    %73 = memref.load %arg1[%72] : memref<24xi32, #tpu.memory_space<smem>>
    %74 = arith.addi %0, %c5_i32 : i32
    %75 = arith.index_cast %74 : i32 to index
    %76 = memref.load %arg2[%75] : memref<24xi32, #tpu.memory_space<smem>>
    %77 = arith.index_cast %73 : i32 to index
    %c0_19 = arith.constant 0 : index
    %78 = vector.load %arg3[%77, %c0_19] : memref<8x32xf32, #tpu.memory_space<vmem>>, vector<1x32xf32>
    %79 = arith.index_cast %c5_i32 : i32 to index
    %c0_20 = arith.constant 0 : index
    %80 = vector.load %arg9[%79, %c0_20] : memref<8x32xf32, #tpu.memory_space<vmem>>, vector<1x32xf32>
    tpu.vector_store %arg9[%79, %c0_20], %78 {strides = array<i32>} : memref<8x32xf32, #tpu.memory_space<vmem>>, vector<1x32xf32>,
    %81 = arith.index_cast %76 : i32 to index
    %c0_21 = arith.constant 0 : index
    %82 = vector.load %arg4[%81, %c0_21] : memref<16x16xf32, #tpu.memory_space<vmem>>, vector<1x16xf32>
    %83 = arith.index_cast %c5_i32 : i32 to index
    %c0_22 = arith.constant 0 : index
    %84 = vector.load %arg10[%83, %c0_22] : memref<8x16xf32, #tpu.memory_space<vmem>>, vector<1x16xf32>
    tpu.vector_store %arg10[%83, %c0_22], %82 {strides = array<i32>} : memref<8x16xf32, #tpu.memory_space<vmem>>, vector<1x16xf32>,
    %c6_i32 = arith.constant 6 : i32
    %85 = arith.addi %0, %c6_i32 : i32
    %86 = arith.index_cast %85 : i32 to index
    %87 = memref.load %arg1[%86] : memref<24xi32, #tpu.memory_space<smem>>
    %88 = arith.addi %0, %c6_i32 : i32
    %89 = arith.index_cast %88 : i32 to index
    %90 = memref.load %arg2[%89] : memref<24xi32, #tpu.memory_space<smem>>
    %91 = arith.index_cast %87 : i32 to index
    %c0_23 = arith.constant 0 : index
    %92 = vector.load %arg3[%91, %c0_23] : memref<8x32xf32, #tpu.memory_space<vmem>>, vector<1x32xf32>
    %93 = arith.index_cast %c6_i32 : i32 to index
    %c0_24 = arith.constant 0 : index
    %94 = vector.load %arg9[%93, %c0_24] : memref<8x32xf32, #tpu.memory_space<vmem>>, vector<1x32xf32>
    tpu.vector_store %arg9[%93, %c0_24], %92 {strides = array<i32>} : memref<8x32xf32, #tpu.memory_space<vmem>>, vector<1x32xf32>,
    %95 = arith.index_cast %90 : i32 to index
    %c0_25 = arith.constant 0 : index
    %96 = vector.load %arg4[%95, %c0_25] : memref<16x16xf32, #tpu.memory_space<vmem>>, vector<1x16xf32>
    %97 = arith.index_cast %c6_i32 : i32 to index
    %c0_26 = arith.constant 0 : index
    %98 = vector.load %arg10[%97, %c0_26] : memref<8x16xf32, #tpu.memory_space<vmem>>, vector<1x16xf32>
    tpu.vector_store %arg10[%97, %c0_26], %96 {strides = array<i32>} : memref<8x16xf32, #tpu.memory_space<vmem>>, vector<1x16xf32>,
    %c7_i32 = arith.constant 7 : i32
    %99 = arith.addi %0, %c7_i32 : i32
    %100 = arith.index_cast %99 : i32 to index
    %101 = memref.load %arg1[%100] : memref<24xi32, #tpu.memory_space<smem>>
    %102 = arith.addi %0, %c7_i32 : i32
    %103 = arith.index_cast %102 : i32 to index
    %104 = memref.load %arg2[%103] : memref<24xi32, #tpu.memory_space<smem>>
    %105 = arith.index_cast %101 : i32 to index
    %c0_27 = arith.constant 0 : index
    %106 = vector.load %arg3[%105, %c0_27] : memref<8x32xf32, #tpu.memory_space<vmem>>, vector<1x32xf32>
    %107 = arith.index_cast %c7_i32 : i32 to index
    %c0_28 = arith.constant 0 : index
    %108 = vector.load %arg9[%107, %c0_28] : memref<8x32xf32, #tpu.memory_space<vmem>>, vector<1x32xf32>
    tpu.vector_store %arg9[%107, %c0_28], %106 {strides = array<i32>} : memref<8x32xf32, #tpu.memory_space<vmem>>, vector<1x32xf32>,
    %109 = arith.index_cast %104 : i32 to index
    %c0_29 = arith.constant 0 : index
    %110 = vector.load %arg4[%109, %c0_29] : memref<16x16xf32, #tpu.memory_space<vmem>>, vector<1x16xf32>
    %111 = arith.index_cast %c7_i32 : i32 to index
    %c0_30 = arith.constant 0 : index
    %112 = vector.load %arg10[%111, %c0_30] : memref<8x16xf32, #tpu.memory_space<vmem>>, vector<1x16xf32>
    tpu.vector_store %arg10[%111, %c0_30], %110 {strides = array<i32>} : memref<8x16xf32, #tpu.memory_space<vmem>>, vector<1x16xf32>,
    %c8_i32_31 = arith.constant 8 : i32
    %c0_32 = arith.constant 0 : index
    %c0_33 = arith.constant 0 : index
    %113 = vector.load %arg9[%c0_32, %c0_33] : memref<8x32xf32, #tpu.memory_space<vmem>>, vector<8x32xf32>
    %114 = arith.truncf %113 : vector<8x32xf32> to vector<8x32xbf16>
    %c0_34 = arith.constant 0 : index
    %c0_35 = arith.constant 0 : index
    %115 = vector.load %arg10[%c0_34, %c0_35] : memref<8x16xf32, #tpu.memory_space<vmem>>, vector<8x16xf32>
    %116 = arith.truncf %115 : vector<8x16xf32> to vector<8x16xbf16>
    %c0_36 = arith.constant 0 : index
    %c0_37 = arith.constant 0 : index
    %117 = vector.load %arg5[%c0_36, %c0_37] : memref<32x128xbf16, #tpu.memory_space<vmem>>, vector<32x128xbf16>
    %cst = arith.constant dense<0.000000e+00> : vector<8x128xf32>
    %118 = tpu.matmul %114, %117, %cst {dimension_numbers = #tpu.dot_dimension_numbers<[1], [0], [0], [1], [0, 0, 1, 1], [], []>} : vector<8x32xbf16>, vector<32x128xbf16>, vector<8x128xf32> -> vector<8x128xf32>
    %c0_38 = arith.constant 0 : index
    %c0_39 = arith.constant 0 : index
    %119 = vector.load %arg6[%c0_38, %c0_39] : memref<16x128xbf16, #tpu.memory_space<vmem>>, vector<16x128xbf16>
    %cst_40 = arith.constant dense<0.000000e+00> : vector<8x128xf32>
    %120 = tpu.matmul %116, %119, %cst_40 {dimension_numbers = #tpu.dot_dimension_numbers<[1], [0], [0], [1], [0, 0, 1, 1], [], []>} : vector<8x16xbf16>, vector<16x128xbf16>, vector<8x128xf32> -> vector<8x128xf32>
    %121 = arith.addf %118, %120 : vector<8x128xf32>
    %c0_41 = arith.constant 0 : index
    %c0_42 = arith.constant 0 : index
    %122 = vector.load %arg7[%c0_41, %c0_42] : memref<1x128xf32, #tpu.memory_space<vmem>>, vector<1x128xf32>
    %123 = vector.broadcast %122 : vector<1x128xf32> to vector<8x128xf32>
    %124 = arith.addf %121, %123 : vector<8x128xf32>
    %125 = tpu.iota {dimensions = array<i32: 1>} : vector<8x128xi32>
    %c2_i32_43 = arith.constant 2 : i32
    %126 = vector.broadcast %c2_i32_43 : i32 to vector<8x128xi32>
    %127 = arith.cmpi slt, %125, %126 : vector<8x128xi32>
    %cst_44 = arith.constant -1.000000e+30 : f32
    %128 = vector.broadcast %cst_44 : f32 to vector<8x128xf32>
    %129 = arith.select %127, %124, %128 : vector<8x128xi1>, vector<8x128xf32>
    %cst_45 = arith.constant dense<0xFF800000> : vector<8xf32>
    %130 = vector.multi_reduction <maximumf>, %129, %cst_45 [1] : vector<8x128xf32> to vector<8xf32>
    %131 = vector.shape_cast %130 : vector<8xf32> to vector<8x1xf32>
    %132 = vector.broadcast %131 : vector<8x1xf32> to vector<8x128xf32>
    %133 = arith.subf %129, %132 : vector<8x128xf32>
    %134 = math.exp %133 : vector<8x128xf32>
    %cst_46 = arith.constant dense<0.000000e+00> : vector<8xf32>
    %135 = vector.multi_reduction <add>, %134, %cst_46 [1] : vector<8x128xf32> to vector<8xf32>
    %136 = vector.shape_cast %135 : vector<8xf32> to vector<8x1xf32>
    %137 = vector.broadcast %136 : vector<8x1xf32> to vector<8x128xf32>
    %138 = arith.divf %134, %137 : vector<8x128xf32>
    %c0_47 = arith.constant 0 : index
    %c0_48 = arith.constant 0 : index
    %139 = vector.load %arg8[%c0_47, %c0_48] : memref<8x128xf32, #tpu.memory_space<vmem>>, vector<8x128xf32>
    tpu.vector_store %arg8[%c0_47, %c0_48], %138 {strides = array<i32>} : memref<8x128xf32, #tpu.memory_space<vmem>>, vector<8x128xf32>,
    return
  }
  func.func @transform_0(%arg0: i32, %arg1: memref<24xi32, #tpu.memory_space<smem>>, %arg2: memref<24xi32, #tpu.memory_space<smem>>) -> (i32, i32) {
    %c0_i32 = arith.constant 0 : i32
    %c0_i32_0 = arith.constant 0 : i32
    %c0_i32_1 = arith.constant 0 : i32
    return %c0_i32, %c0_i32_0 : i32, i32
  }
  func.func @transform_1(%arg0: i32, %arg1: memref<24xi32, #tpu.memory_space<smem>>, %arg2: memref<24xi32, #tpu.memory_space<smem>>) -> (i32, i32) {
    %c0_i32 = arith.constant 0 : i32
    %c0_i32_0 = arith.constant 0 : i32
    %c0_i32_1 = arith.constant 0 : i32
    return %c0_i32, %c0_i32_0 : i32, i32
  }
  func.func @transform_2(%arg0: i32, %arg1: memref<24xi32, #tpu.memory_space<smem>>, %arg2: memref<24xi32, #tpu.memory_space<smem>>) -> (i32, i32) {
    %c0_i32 = arith.constant 0 : i32
    %c0_i32_0 = arith.constant 0 : i32
    %c0_i32_1 = arith.constant 0 : i32
    return %c0_i32, %c0_i32_0 : i32, i32
  }
  func.func @transform_3(%arg0: i32, %arg1: memref<24xi32, #tpu.memory_space<smem>>, %arg2: memref<24xi32, #tpu.memory_space<smem>>) -> (i32, i32) {
    %c0_i32 = arith.constant 0 : i32
    %c0_i32_0 = arith.constant 0 : i32
    %c0_i32_1 = arith.constant 0 : i32
    return %c0_i32, %c0_i32_0 : i32, i32
  }
  func.func @transform_4(%arg0: i32, %arg1: memref<24xi32, #tpu.memory_space<smem>>, %arg2: memref<24xi32, #tpu.memory_space<smem>>) -> (i32, i32) {
    %c0_i32 = arith.constant 0 : i32
    %c0_i32_0 = arith.constant 0 : i32
    %c0_i32_1 = arith.constant 0 : i32
    return %c0_i32, %c0_i32_0 : i32, i32
  }
  func.func @transform_5(%arg0: i32, %arg1: memref<24xi32, #tpu.memory_space<smem>>, %arg2: memref<24xi32, #tpu.memory_space<smem>>) -> (i32, i32) {
    %c0_i32 = arith.constant 0 : i32
    %c0_i32_0 = arith.constant 0 : i32
    return %arg0, %c0_i32 : i32, i32
  }
}

</mosaic_0001>

<llo_original>
// kernel: graphsage_forward.2
$region0: #{graphsage_forward.2}
  #allocation0 [shape = 'u32[]', space=smem, size = 0x4, offset = 0x4, fixed_abs, tag = 'smem constant byte address 0x4 - core index']
  #allocation1 [shape = 'u32[144,128]{1,0:T(1,128)}', space=vmem, size = 0x12000, scoped, tag = 'internal scratch']
  %s0 = inlined_call_operand.vmem [shape: bf16[8,32], index: 0, kind: input, shape index: {}]
  %s1 = inlined_call_operand.vmem [shape: bf16[16,16], index: 1, kind: input, shape index: {}]
  %s2 = inlined_call_operand.vmem [shape: bf16[8,16], index: 2, kind: input, shape index: {}]
  %s3 = inlined_call_operand.vmem [shape: bf16[16,8], index: 3, kind: input, shape index: {}]
  %s4 = inlined_call_operand.vmem [shape: bf16[32,32], index: 4, kind: input, shape index: {}]
  %s5 = inlined_call_operand.vmem [shape: bf16[16,32], index: 5, kind: input, shape index: {}]
  %s6 = inlined_call_operand.vmem [shape: f32[1,32], index: 6, kind: input, shape index: {}]
  %s7 = inlined_call_operand.vmem [shape: bf16[16,16], index: 7, kind: input, shape index: {}]
  %s8 = inlined_call_operand.vmem [shape: bf16[32,16], index: 8, kind: input, shape index: {}]
  %s9 = inlined_call_operand.vmem [shape: f32[1,16], index: 9, kind: input, shape index: {}]
  %s10 = inlined_call_operand.vmem [shape: bf16[32,32], index: 10, kind: input, shape index: {}]
  %s11 = inlined_call_operand.vmem [shape: bf16[16,32], index: 11, kind: input, shape index: {}]
  %s12 = inlined_call_operand.hbm [shape: f32[1,32], index: 12, kind: input, shape index: {}]
  %s13 = inlined_call_operand.hbm [shape: bf16[16,16], index: 13, kind: input, shape index: {}]
  %s14 = inlined_call_operand.vmem [shape: bf16[32,16], index: 14, kind: input, shape index: {}]
  %s15 = inlined_call_operand.vmem [shape: f32[1,16], index: 15, kind: input, shape index: {}]
  %s16 = inlined_call_operand.vmem [shape: f32[8,32], index: 16, kind: output, shape index: {0}]
  %s17 = inlined_call_operand.vmem [shape: f32[16,16], index: 17, kind: output, shape index: {1}]
  %18 = xla_tuple %s16, %s17
  %s19 = sld [smem:[#allocation0]]
  $region90: #{graphsage_forward.2} parent=0
    _
  %s21 = ssub.s32 1, %s19
  %s22 = scalar_select 0, %s21, %s19
  $region1: #{graphsage_forward.2} parent=0
    #allocation2 [shape = 'u8[512]{0}', space=vmem, size = 0x400, scoped, tag = 'input window, operand 12, single buffered']
    #allocation3 [shape = 's32[1]{0}', space=sflag, size = 0x4, scoped, tag = 'scoped memory for graphsage_forward.2']
    #allocation4 [shape = 'u8[4096]{0}', space=vmem, size = 0x1000, scoped, tag = 'input window, operand 13, single buffered']
    #allocation5 [shape = 's32[1]{0}', space=sflag, size = 0x4, scoped, tag = 'scoped memory for graphsage_forward.2']
    %23 = vsyncpa [#allocation3], 0
    %24 = vsyncpa [#allocation5], 0
    // Predicated region
    $region2: #{graphsage_forward.2} parent=1 // pred_check
      _
    $region3: #{graphsage_forward.2} parent=1 // pred_check_branch
      %26 = sbr.rel (0) target = $region5
    $region4: #{graphsage_forward.2} parent=1 // pred_region
      _
    $region5: #{graphsage_forward.2} parent=1 // pred_fallthru
      _
    // Predicated region
    $region6: #{graphsage_forward.2} parent=1 // pred_check
      _
    $region7: #{graphsage_forward.2} parent=1 // pred_check_branch
      %28 = sbr.rel (0) target = $region9
    $region8: #{graphsage_forward.2} parent=1 // pred_region
      _
    $region9: #{graphsage_forward.2} parent=1 // pred_fallthru
      _
    // Predicated region
    $region10: #{graphsage_forward.2} parent=1 // pred_check
      _
    $region11: #{graphsage_forward.2} parent=1 // pred_check_branch
      %30 = sbr.rel (0) target = $region13
    $region12: #{graphsage_forward.2} parent=1 // pred_region
      _
    $region13: #{graphsage_forward.2} parent=1 // pred_fallthru
      _
    // Predicated region
    $region14: #{graphsage_forward.2} parent=1 // pred_check
      _
    $region15: #{graphsage_forward.2} parent=1 // pred_check_branch
      %32 = sbr.rel (0) target = $region17
    $region16: #{graphsage_forward.2} parent=1 // pred_region
      _
    $region17: #{graphsage_forward.2} parent=1 // pred_fallthru
      _
    // Predicated region
    $region18: #{graphsage_forward.2} parent=1 // pred_check
      _
    $region19: #{graphsage_forward.2} parent=1 // pred_check_branch
      %34 = sbr.rel (0) target = $region21
    $region20: #{graphsage_forward.2} parent=1 // pred_region
      _
    $region21: #{graphsage_forward.2} parent=1 // pred_fallthru
      _
    // Predicated region
    $region22: #{graphsage_forward.2} parent=1 // pred_check
      _
    $region23: #{graphsage_forward.2} parent=1 // pred_check_branch
      %36 = sbr.rel (0) target = $region25
    $region24: #{graphsage_forward.2} parent=1 // pred_region
      _
    $region25: #{graphsage_forward.2} parent=1 // pred_fallthru
      _
    // Predicated region
    $region26: #{graphsage_forward.2} parent=1 // pred_check
      _
    $region27: #{graphsage_forward.2} parent=1 // pred_check_branch
      %38 = sbr.rel (0) target = $region29
    $region28: #{graphsage_forward.2} parent=1 // pred_region
      _
    $region29: #{graphsage_forward.2} parent=1 // pred_fallthru
      _
    // Predicated region
    $region30: #{graphsage_forward.2} parent=1 // pred_check
      _
    $region31: #{graphsage_forward.2} parent=1 // pred_check_branch
      %40 = sbr.rel (0) target = $region33
    $region32: #{graphsage_forward.2} parent=1 // pred_region
      _
    $region33: #{graphsage_forward.2} parent=1 // pred_fallthru
      _
    // Predicated region
    $region34: #{graphsage_forward.2} parent=1 // pred_check
      _
    $region35: #{graphsage_forward.2} parent=1 // pred_check_branch
      %42 = sbr.rel (0) target = $region37
    $region36: #{graphsage_forward.2} parent=1 // pred_region
      _
    $region37: #{graphsage_forward.2} parent=1 // pred_fallthru
      _
    // Predicated region
    $region38: #{graphsage_forward.2} parent=1 // pred_check
      _
    $region39: #{graphsage_forward.2} parent=1 // pred_check_branch
      %44 = sbr.rel (0) target = $region41
    $region40: #{graphsage_forward.2} parent=1 // pred_region
      _
    $region41: #{graphsage_forward.2} parent=1 // pred_fallthru
      _
    // Predicated region
    $region42: #{graphsage_forward.2} parent=1 // pred_check
      _
    $region43: #{graphsage_forward.2} parent=1 // pred_check_branch
      %46 = sbr.rel (0) target = $region45
    $region44: #{graphsage_forward.2} parent=1 // pred_region
      _
    $region45: #{graphsage_forward.2} parent=1 // pred_fallthru
      _
    // Predicated region
    $region46: #{graphsage_forward.2} parent=1 // pred_check
      _
    $region47: #{graphsage_forward.2} parent=1 // pred_check_branch
      %48 = sbr.rel (0) target = $region49
    $region48: #{graphsage_forward.2} parent=1 // pred_region
      _
    $region49: #{graphsage_forward.2} parent=1 // pred_fallthru
      _
    // Predicated region
    $region50: #{graphsage_forward.2} parent=1 // pred_check
      _
    $region51: #{graphsage_forward.2} parent=1 // pred_check_branch
      %50 = sbr.rel (0) target = $region53
    $region52: #{graphsage_forward.2} parent=1 // pred_region
      %s52 = ssub.s32 16, 16
      %53 = vsyncadd [#allocation3], %s52
      %s55 = sshll.u32 [#allocation2], 4
      %s56 = int_to_ptr.vmem [resolvable:$true] %s55
      %58 = dma.hbm_to_vmem [thread:$0]  %s12, 16, %s56, [#allocation3]
    $region53: #{graphsage_forward.2} parent=1 // pred_fallthru
      _
    // Predicated region
    $region54: #{graphsage_forward.2} parent=1 // pred_check
      _
    $region55: #{graphsage_forward.2} parent=1 // pred_check_branch
      %60 = sbr.rel (0) target = $region57
    $region56: #{graphsage_forward.2} parent=1 // pred_region
      %s62 = ssub.s32 128, 128
      %63 = vsyncadd [#allocation5], %s62
      %s64 = sshll.u32 [#allocation4], 4
      %s65 = int_to_ptr.vmem [resolvable:$true] %s64
      %70 = dma.hbm_to_vmem [thread:$0]  %s13, 128, %s65, [#allocation5], 64, 64, 4
    $region57: #{graphsage_forward.2} parent=1 // pred_fallthru
      _
    // Predicated region
    $region58: #{graphsage_forward.2} parent=1 // pred_check
      _
    $region59: #{graphsage_forward.2} parent=1 // pred_check_branch
      %72 = sbr.rel (0) target = $region61
    $region60: #{graphsage_forward.2} parent=1 // pred_region
      _
    $region61: #{graphsage_forward.2} parent=1 // pred_fallthru
      _
    // Predicated region
    $region62: #{graphsage_forward.2} parent=1 // pred_check
      _
    $region63: #{graphsage_forward.2} parent=1 // pred_check_branch
      %74 = sbr.rel (0) target = $region65
    $region64: #{graphsage_forward.2} parent=1 // pred_region
      _
    $region65: #{graphsage_forward.2} parent=1 // pred_fallthru
      _
    // Predicated region
    $region66: #{graphsage_forward.2} parent=1 // pred_check
      _
    $region67: #{graphsage_forward.2} parent=1 // pred_check_branch
      %76 = sbr.rel (0) target = $region69
    $region68: #{graphsage_forward.2} parent=1 // pred_region
      %77 = dma.done [#allocation3], 16
    $region69: #{graphsage_forward.2} parent=1 // pred_fallthru
      _
    // Predicated region
    $region70: #{graphsage_forward.2} parent=1 // pred_check
      _
    $region71: #{graphsage_forward.2} parent=1 // pred_check_branch
      %79 = sbr.rel (0) target = $region73
    $region72: #{graphsage_forward.2} parent=1 // pred_region
      %80 = dma.done [#allocation5], 128
    $region73: #{graphsage_forward.2} parent=1 // pred_fallthru
      _
    %v82 = vld [vmem:[%s0] sm:$0xf]
    %v83 = vld [vmem:[%s1] sm:$0xf]
    %v84 = vld [vmem:[%s1 + $0x4] sm:$0xf]
    %v85 = vld [vmem:[%s2] sm:$0xf]
    %v86 = vld [vmem:[%s3] sm:$0xf]
    %v87 = vld [vmem:[%s3 + $0x4] sm:$0xf]
    %v90 = vunpack.c.l.b16 %v83
    %v91 = vunpack.c.l.b16 %v84
    %v92 = vpack.c.b16 %v91, %v90
    %vm94 = vcmask 130048
    %v96 = vsel %vm94, %v85, 0
    %98 = vmatprep.subr.bf16.mxu0 0
    %99 = vmatpush1.bf16.msra.mxu0 %v92
    %100 = vmatprep.subr.bf16.mxu0 0
    %101 = vmatpush1.bf16.msra.mxu0 0
    %102 = vmatprep.subr.bf16.mxu0 0
    %103 = vmatpush1.bf16.msra.mxu0 0
    %104 = vmatprep.subr.bf16.mxu0 0
    %105 = vmatpush1.bf16.msra.mxu0 0
    %106 = vmatprep.subr.bf16.mxu0 0
    %107 = vmatpush1.bf16.msra.mxu0 0
    %108 = vmatprep.subr.bf16.mxu0 0
    %109 = vmatpush1.bf16.msra.mxu0 0
    %110 = vmatprep.subr.bf16.mxu0 0
    %111 = vmatpush1.bf16.msra.mxu0 0
    %112 = vmatprep.subr.bf16.mxu0 0
    %113 = vmatpush1.bf16.msra.mxu0 0
    %114 = vmatprep.subr.bf16.mxu0 0
    %115 = vmatpush1.bf16.msra.mxu0 0
    %116 = vmatprep.subr.bf16.mxu0 0
    %117 = vmatpush1.bf16.msra.mxu0 0
    %118 = vmatprep.subr.bf16.mxu0 0
    %119 = vmatpush1.bf16.msra.mxu0 0
    %120 = vmatprep.subr.bf16.mxu0 0
    %121 = vmatpush1.bf16.msra.mxu0 0
    %122 = vmatprep.subr.bf16.mxu0 0
    %123 = vmatpush1.bf16.msra.mxu0 0
    %124 = vmatprep.subr.bf16.mxu0 0
    %125 = vmatpush1.bf16.msra.mxu0 0
    %126 = vmatprep.subr.bf16.mxu0 0
    %127 = vmatpush1.bf16.msra.mxu0 0
    %128 = vmatprep.subr.bf16.mxu0 0
    %129 = vmatpush1.bf16.msra.mxu0 0
    %130 = vmatprep.mubr.bf16.mxu0 0
    %131 = vmatmul.mubr.bf16.gmra.mrb[0].mxu0 %v96
    %v132 = vpop.f32.mrb[0].mxu0
    %v133 = vadd.f32 0.0, %v132
    %v134 = vpop.f32.mrb[0].mxu0
    %v135 = vpop.f32.mrb[0].mxu0
    %v136 = vpop.f32.mrb[0].mxu0
    %137 = vdwg.mxu0
    %v138 = vpack.c.bf16 %v133, %v133
    %v141 = vunpack.c.l.b16 %v86
    %v142 = vunpack.c.l.b16 %v87
    %v143 = vpack.c.b16 %v142, %v141
    %vm144 = vcmask 64512
    %v146 = vsel %vm144, %v143, 0
    %vm148 = vcmask 1043456
    %v150 = vsel %vm148, %v82, 0
    %152 = vmatprep.subr.bf16.mxu0 0
    %153 = vmatpush1.bf16.msra.mxu0 %v150
    %154 = vmatprep.subr.bf16.mxu0 0
    %155 = vmatpush1.bf16.msra.mxu0 0
    %156 = vmatprep.subr.bf16.mxu0 0
    %157 = vmatpush1.bf16.msra.mxu0 0
    %158 = vmatprep.subr.bf16.mxu0 0
    %159 = vmatpush1.bf16.msra.mxu0 0
    %160 = vmatprep.subr.bf16.mxu0 0
    %161 = vmatpush1.bf16.msra.mxu0 0
    %162 = vmatprep.subr.bf16.mxu0 0
    %163 = vmatpush1.bf16.msra.mxu0 0
    %164 = vmatprep.subr.bf16.mxu0 0
    %165 = vmatpush1.bf16.msra.mxu0 0
    %166 = vmatprep.subr.bf16.mxu0 0
    %167 = vmatpush1.bf16.msra.mxu0 0
    %168 = vmatprep.subr.bf16.mxu0 0
    %169 = vmatpush1.bf16.msra.mxu0 0
    %170 = vmatprep.subr.bf16.mxu0 0
    %171 = vmatpush1.bf16.msra.mxu0 0
    %172 = vmatprep.subr.bf16.mxu0 0
    %173 = vmatpush1.bf16.msra.mxu0 0
    %174 = vmatprep.subr.bf16.mxu0 0
    %175 = vmatpush1.bf16.msra.mxu0 0
    %176 = vmatprep.subr.bf16.mxu0 0
    %177 = vmatpush1.bf16.msra.mxu0 0
    %178 = vmatprep.subr.bf16.mxu0 0
    %179 = vmatpush1.bf16.msra.mxu0 0
    %180 = vmatprep.subr.bf16.mxu0 0
    %181 = vmatpush1.bf16.msra.mxu0 0
    %182 = vmatprep.subr.bf16.mxu0 0
    %183 = vmatpush1.bf16.msra.mxu0 0
    %184 = vmatprep.mubr.bf16.mxu0 0
    %185 = vmatmul.mubr.bf16.gmra.mrb[0].mxu0 %v146
    %v186 = vpop.f32.mrb[0].mxu0
    %v187 = vadd.f32 0.0, %v186
    %v188 = vpop.f32.mrb[0].mxu0
    %v189 = vpop.f32.mrb[0].mxu0
    %v190 = vadd.f32 0.0, %v189
    %v191 = vpop.f32.mrb[0].mxu0
    %192 = vdwg.mxu0
    %v193 = vpack.c.bf16 %v190, %v187
    %v194 = vld [vmem:[%s4] sm:$0xf]
    %v195 = vld [vmem:[%s4 + $0x4] sm:$0xf]
    %v196 = vld [vmem:[%s4 + $0x8] sm:$0xf]
    %v197 = vld [vmem:[%s4 + $0xc] sm:$0xf]
    %v198 = vld [vmem:[%s5] sm:$0xf]
    %v199 = vld [vmem:[%s5 + $0x4] sm:$0xf]
    %v202 = vunpack.c.l.b16 %v198
    %v203 = vunpack.c.l.b16 %v199
    %v204 = vpack.c.b16 %v203, %v202
    %v207 = vsel %vm94, %v138, 0
    %209 = vmatprep.subr.bf16.mxu0 0
    %210 = vmatpush1.bf16.msra.mxu0 %v204
    %211 = vmatprep.subr.bf16.mxu0 0
    %212 = vmatpush1.bf16.msra.mxu0 0
    %213 = vmatprep.subr.bf16.mxu0 0
    %214 = vmatpush1.bf16.msra.mxu0 0
    %215 = vmatprep.subr.bf16.mxu0 0
    %216 = vmatpush1.bf16.msra.mxu0 0
    %217 = vmatprep.subr.bf16.mxu0 0
    %218 = vmatpush1.bf16.msra.mxu0 0
    %219 = vmatprep.subr.bf16.mxu0 0
    %220 = vmatpush1.bf16.msra.mxu0 0
    %221 = vmatprep.subr.bf16.mxu0 0
    %222 = vmatpush1.bf16.msra.mxu0 0
    %223 = vmatprep.subr.bf16.mxu0 0
    %224 = vmatpush1.bf16.msra.mxu0 0
    %225 = vmatprep.subr.bf16.mxu0 0
    %226 = vmatpush1.bf16.msra.mxu0 0
    %227 = vmatprep.subr.bf16.mxu0 0
    %228 = vmatpush1.bf16.msra.mxu0 0
    %229 = vmatprep.subr.bf16.mxu0 0
    %230 = vmatpush1.bf16.msra.mxu0 0
    %231 = vmatprep.subr.bf16.mxu0 0
    %232 = vmatpush1.bf16.msra.mxu0 0
    %233 = vmatprep.subr.bf16.mxu0 0
    %234 = vmatpush1.bf16.msra.mxu0 0
    %235 = vmatprep.subr.bf16.mxu0 0
    %236 = vmatpush1.bf16.msra.mxu0 0
    %237 = vmatprep.subr.bf16.mxu0 0
    %238 = vmatpush1.bf16.msra.mxu0 0
    %239 = vmatprep.subr.bf16.mxu0 0
    %240 = vmatpush1.bf16.msra.mxu0 0
    %241 = vmatprep.mubr.bf16.mxu0 0
    %242 = vmatmul.mubr.bf16.gmra.mrb[0].mxu0 %v207
    %v243 = vpop.f32.mrb[0].mxu0
    %v244 = vadd.f32 0.0, %v243
    %v245 = vpop.f32.mrb[0].mxu0
    %v246 = vpop.f32.mrb[0].mxu0
    %v247 = vpop.f32.mrb[0].mxu0
    %248 = vdwg.mxu0
    %v253 = vunpack.c.l.b16 %v194
    %v254 = vunpack.c.l.b16 %v195
    %v255 = vunpack.c.l.b16 %v196
    %v256 = vunpack.c.l.b16 %v197
    %v257 = vpack.c.b16 %v254, %v253
    %v258 = vpack.c.b16 %v256, %v255
    %vm261 = vcmask 261120
    %v262 = vsel %vm261, %v82, 0
    %264 = vmatprep.subr.bf16.mxu0 0
    %265 = vmatpush1.bf16.msra.mxu0 %v257
    %266 = vmatprep.subr.bf16.mxu0 0
    %267 = vmatpush1.bf16.msra.mxu0 %v258
    %268 = vmatprep.subr.bf16.mxu0 0
    %269 = vmatpush1.bf16.msra.mxu0 0
    %270 = vmatprep.subr.bf16.mxu0 0
    %271 = vmatpush1.bf16.msra.mxu0 0
    %272 = vmatprep.subr.bf16.mxu0 0
    %273 = vmatpush1.bf16.msra.mxu0 0
    %274 = vmatprep.subr.bf16.mxu0 0
    %275 = vmatpush1.bf16.msra.mxu0 0
    %276 = vmatprep.subr.bf16.mxu0 0
    %277 = vmatpush1.bf16.msra.mxu0 0
    %278 = vmatprep.subr.bf16.mxu0 0
    %279 = vmatpush1.bf16.msra.mxu0 0
    %280 = vmatprep.subr.bf16.mxu0 0
    %281 = vmatpush1.bf16.msra.mxu0 0
    %282 = vmatprep.subr.bf16.mxu0 0
    %283 = vmatpush1.bf16.msra.mxu0 0
    %284 = vmatprep.subr.bf16.mxu0 0
    %285 = vmatpush1.bf16.msra.mxu0 0
    %286 = vmatprep.subr.bf16.mxu0 0
    %287 = vmatpush1.bf16.msra.mxu0 0
    %288 = vmatprep.subr.bf16.mxu0 0
    %289 = vmatpush1.bf16.msra.mxu0 0
    %290 = vmatprep.subr.bf16.mxu0 0
    %291 = vmatpush1.bf16.msra.mxu0 0
    %292 = vmatprep.subr.bf16.mxu0 0
    %293 = vmatpush1.bf16.msra.mxu0 0
    %294 = vmatprep.subr.bf16.mxu0 0
    %295 = vmatpush1.bf16.msra.mxu0 0
    %296 = vmatprep.mubr.bf16.mxu0 0
    %297 = vmatmul.mubr.bf16.gmra.mrb[0].mxu0 %v262
    %v298 = vpop.f32.mrb[0].mxu0
    %v299 = vadd.f32 %v244, %v298
    %v300 = vpop.f32.mrb[0].mxu0
    %v301 = vpop.f32.mrb[0].mxu0
    %v302 = vpop.f32.mrb[0].mxu0
    %303 = vdwg.mxu0
    %v304 = vld [vmem:[%s6] sm:$0x1]
    %v306 = vlaneseq
    %v307 = vshrl.u32 %v306, 7
    %v308 = vsub.s32 0, %v307
    %v309 = vrot.slane %v304, %v308
    %v311 = vadd.f32 %v299, %v309
    %v312 = vld [vmem:[%s7] sm:$0xf]
    %v313 = vld [vmem:[%s7 + $0x4] sm:$0xf]
    %v314 = vld [vmem:[%s8] sm:$0xf]
    %v315 = vld [vmem:[%s8 + $0x4] sm:$0xf]
    %v316 = vld [vmem:[%s8 + $0x8] sm:$0xf]
    %v317 = vld [vmem:[%s8 + $0xc] sm:$0xf]
    %v322 = vunpack.c.l.b16 %v314
    %v323 = vunpack.c.l.b16 %v315
    %v324 = vunpack.c.l.b16 %v316
    %v325 = vunpack.c.l.b16 %v317
    %v326 = vpack.c.b16 %v323, %v322
    %v327 = vpack.c.b16 %v325, %v324
    %v331 = vsel %vm261, %v193, 0
    %333 = vmatprep.subr.bf16.mxu0 0
    %334 = vmatpush1.bf16.msra.mxu0 %v326
    %335 = vmatprep.subr.bf16.mxu0 0
    %336 = vmatpush1.bf16.msra.mxu0 %v327
    %337 = vmatprep.subr.bf16.mxu0 0
    %338 = vmatpush1.bf16.msra.mxu0 0
    %339 = vmatprep.subr.bf16.mxu0 0
    %340 = vmatpush1.bf16.msra.mxu0 0
    %341 = vmatprep.subr.bf16.mxu0 0
    %342 = vmatpush1.bf16.msra.mxu0 0
    %343 = vmatprep.subr.bf16.mxu0 0
    %344 = vmatpush1.bf16.msra.mxu0 0
    %345 = vmatprep.subr.bf16.mxu0 0
    %346 = vmatpush1.bf16.msra.mxu0 0
    %347 = vmatprep.subr.bf16.mxu0 0
    %348 = vmatpush1.bf16.msra.mxu0 0
    %349 = vmatprep.subr.bf16.mxu0 0
    %350 = vmatpush1.bf16.msra.mxu0 0
    %351 = vmatprep.subr.bf16.mxu0 0
    %352 = vmatpush1.bf16.msra.mxu0 0
    %353 = vmatprep.subr.bf16.mxu0 0
    %354 = vmatpush1.bf16.msra.mxu0 0
    %355 = vmatprep.subr.bf16.mxu0 0
    %356 = vmatpush1.bf16.msra.mxu0 0
    %357 = vmatprep.subr.bf16.mxu0 0
    %358 = vmatpush1.bf16.msra.mxu0 0
    %359 = vmatprep.subr.bf16.mxu0 0
    %360 = vmatpush1.bf16.msra.mxu0 0
    %361 = vmatprep.subr.bf16.mxu0 0
    %362 = vmatpush1.bf16.msra.mxu0 0
    %363 = vmatprep.subr.bf16.mxu0 0
    %364 = vmatpush1.bf16.msra.mxu0 0
    %365 = vmatprep.mubr.bf16.mxu0 0
    %366 = vmatmul.mubr.bf16.gmra.mrb[0].mxu0 %v331
    %v367 = vpop.f32.mrb[0].mxu0
    %v368 = vadd.f32 0.0, %v367
    %v369 = vpop.f32.mrb[0].mxu0
    %v370 = vpop.f32.mrb[0].mxu0
    %v371 = vadd.f32 0.0, %v370
    %v372 = vpop.f32.mrb[0].mxu0
    %373 = vdwg.mxu0
    %v376 = vunpack.c.l.b16 %v312
    %v377 = vunpack.c.l.b16 %v313
    %v378 = vpack.c.b16 %v377, %v376
    %v381 = vsel %vm94, %v92, 0
    %383 = vmatprep.subr.bf16.mxu0 0
    %384 = vmatpush1.bf16.msra.mxu0 %v378
    %385 = vmatprep.subr.bf16.mxu0 0
    %386 = vmatpush1.bf16.msra.mxu0 0
    %387 = vmatprep.subr.bf16.mxu0 0
    %388 = vmatpush1.bf16.msra.mxu0 0
    %389 = vmatprep.subr.bf16.mxu0 0
    %390 = vmatpush1.bf16.msra.mxu0 0
    %391 = vmatprep.subr.bf16.mxu0 0
    %392 = vmatpush1.bf16.msra.mxu0 0
    %393 = vmatprep.subr.bf16.mxu0 0
    %394 = vmatpush1.bf16.msra.mxu0 0
    %395 = vmatprep.subr.bf16.mxu0 0
    %396 = vmatpush1.bf16.msra.mxu0 0
    %397 = vmatprep.subr.bf16.mxu0 0
    %398 = vmatpush1.bf16.msra.mxu0 0
    %399 = vmatprep.subr.bf16.mxu0 0
    %400 = vmatpush1.bf16.msra.mxu0 0
    %401 = vmatprep.subr.bf16.mxu0 0
    %402 = vmatpush1.bf16.msra.mxu0 0
    %403 = vmatprep.subr.bf16.mxu0 0
    %404 = vmatpush1.bf16.msra.mxu0 0
    %405 = vmatprep.subr.bf16.mxu0 0
    %406 = vmatpush1.bf16.msra.mxu0 0
    %407 = vmatprep.subr.bf16.mxu0 0
    %408 = vmatpush1.bf16.msra.mxu0 0
    %409 = vmatprep.subr.bf16.mxu0 0
    %410 = vmatpush1.bf16.msra.mxu0 0
    %411 = vmatprep.subr.bf16.mxu0 0
    %412 = vmatpush1.bf16.msra.mxu0 0
    %413 = vmatprep.subr.bf16.mxu0 0
    %414 = vmatpush1.bf16.msra.mxu0 0
    %415 = vmatprep.mubr.bf16.mxu0 0
    %416 = vmatmul.mubr.bf16.gmra.mrb[0].mxu0 %v381
    %v417 = vpop.f32.mrb[0].mxu0
    %v418 = vadd.f32 %v368, %v417
    %v419 = vpop.f32.mrb[0].mxu0
    %v420 = vpop.f32.mrb[0].mxu0
    %v421 = vadd.f32 %v371, %v420
    %v422 = vpop.f32.mrb[0].mxu0
    %423 = vdwg.mxu0
    %v424 = vld [vmem:[%s9] sm:$0x1]
    %v426 = vlaneseq
    %v427 = vshrl.u32 %v426, 7
    %v428 = vsub.s32 0, %v427
    %v429 = vrot.slane %v424, %v428
    %v431 = vadd.f32 %v418, %v429
    %v432 = vadd.f32 %v421, %v429
    %v433 = vmax.f32 %v311, 0.0
    %v434 = vpack.c.bf16 %v433, %v433
    %v435 = vmax.f32 %v431, 0.0
    %v436 = vmax.f32 %v432, 0.0
    %v437 = vpack.c.bf16 %v436, %v435
    %438 = vmatprep.subr.bf16.mxu0 0
    %439 = vmatpush1.bf16.msra.mxu0 %v437
    %440 = vmatprep.subr.bf16.mxu0 0
    %441 = vmatpush1.bf16.msra.mxu0 0
    %442 = vmatprep.subr.bf16.mxu0 0
    %443 = vmatpush1.bf16.msra.mxu0 0
    %444 = vmatprep.subr.bf16.mxu0 0
    %445 = vmatpush1.bf16.msra.mxu0 0
    %446 = vmatprep.subr.bf16.mxu0 0
    %447 = vmatpush1.bf16.msra.mxu0 0
    %448 = vmatprep.subr.bf16.mxu0 0
    %449 = vmatpush1.bf16.msra.mxu0 0
    %450 = vmatprep.subr.bf16.mxu0 0
    %451 = vmatpush1.bf16.msra.mxu0 0
    %452 = vmatprep.subr.bf16.mxu0 0
    %453 = vmatpush1.bf16.msra.mxu0 0
    %454 = vmatprep.subr.bf16.mxu0 0
    %455 = vmatpush1.bf16.msra.mxu0 0
    %456 = vmatprep.subr.bf16.mxu0 0
    %457 = vmatpush1.bf16.msra.mxu0 0
    %458 = vmatprep.subr.bf16.mxu0 0
    %459 = vmatpush1.bf16.msra.mxu0 0
    %460 = vmatprep.subr.bf16.mxu0 0
    %461 = vmatpush1.bf16.msra.mxu0 0
    %462 = vmatprep.subr.bf16.mxu0 0
    %463 = vmatpush1.bf16.msra.mxu0 0
    %464 = vmatprep.subr.bf16.mxu0 0
    %465 = vmatpush1.bf16.msra.mxu0 0
    %466 = vmatprep.subr.bf16.mxu0 0
    %467 = vmatpush1.bf16.msra.mxu0 0
    %468 = vmatprep.subr.bf16.mxu0 0
    %469 = vmatpush1.bf16.msra.mxu0 0
    %470 = vmatprep.mubr.bf16.mxu0 0
    %471 = vmatmul.mubr.bf16.gmra.mrb[0].mxu0 %v96
    %v472 = vpop.f32.mrb[0].mxu0
    %v473 = vadd.f32 0.0, %v472
    %v474 = vpop.f32.mrb[0].mxu0
    %v475 = vpop.f32.mrb[0].mxu0
    %v476 = vpop.f32.mrb[0].mxu0
    %477 = vdwg.mxu0
    %v478 = vpack.c.bf16 %v473, %v473
    %v480 = vsel %vm148, %v434, 0
    %482 = vmatprep.subr.bf16.mxu0 0
    %483 = vmatpush1.bf16.msra.mxu0 %v480
    %484 = vmatprep.subr.bf16.mxu0 0
    %485 = vmatpush1.bf16.msra.mxu0 0
    %486 = vmatprep.subr.bf16.mxu0 0
    %487 = vmatpush1.bf16.msra.mxu0 0
    %488 = vmatprep.subr.bf16.mxu0 0
    %489 = vmatpush1.bf16.msra.mxu0 0
    %490 = vmatprep.subr.bf16.mxu0 0
    %491 = vmatpush1.bf16.msra.mxu0 0
    %492 = vmatprep.subr.bf16.mxu0 0
    %493 = vmatpush1.bf16.msra.mxu0 0
    %494 = vmatprep.subr.bf16.mxu0 0
    %495 = vmatpush1.bf16.msra.mxu0 0
    %496 = vmatprep.subr.bf16.mxu0 0
    %497 = vmatpush1.bf16.msra.mxu0 0
    %498 = vmatprep.subr.bf16.mxu0 0
    %499 = vmatpush1.bf16.msra.mxu0 0
    %500 = vmatprep.subr.bf16.mxu0 0
    %501 = vmatpush1.bf16.msra.mxu0 0
    %502 = vmatprep.subr.bf16.mxu0 0
    %503 = vmatpush1.bf16.msra.mxu0 0
    %504 = vmatprep.subr.bf16.mxu0 0
    %505 = vmatpush1.bf16.msra.mxu0 0
    %506 = vmatprep.subr.bf16.mxu0 0
    %507 = vmatpush1.bf16.msra.mxu0 0
    %508 = vmatprep.subr.bf16.mxu0 0
    %509 = vmatpush1.bf16.msra.mxu0 0
    %510 = vmatprep.subr.bf16.mxu0 0
    %511 = vmatpush1.bf16.msra.mxu0 0
    %512 = vmatprep.subr.bf16.mxu0 0
    %513 = vmatpush1.bf16.msra.mxu0 0
    %514 = vmatprep.mubr.bf16.mxu0 0
    %515 = vmatmul.mubr.bf16.gmra.mrb[0].mxu0 %v146
    %v516 = vpop.f32.mrb[0].mxu0
    %v517 = vadd.f32 0.0, %v516
    %v518 = vpop.f32.mrb[0].mxu0
    %v519 = vpop.f32.mrb[0].mxu0
    %v520 = vadd.f32 0.0, %v519
    %v521 = vpop.f32.mrb[0].mxu0
    %522 = vdwg.mxu0
    %v523 = vpack.c.bf16 %v520, %v517
    %v524 = vld [vmem:[%s10] sm:$0xf]
    %v525 = vld [vmem:[%s10 + $0x4] sm:$0xf]
    %v526 = vld [vmem:[%s10 + $0x8] sm:$0xf]
    %v527 = vld [vmem:[%s10 + $0xc] sm:$0xf]
    %v528 = vld [vmem:[%s11] sm:$0xf]
    %v529 = vld [vmem:[%s11 + $0x4] sm:$0xf]
    %v532 = vunpack.c.l.b16 %v528
    %v533 = vunpack.c.l.b16 %v529
    %v534 = vpack.c.b16 %v533, %v532
    %v537 = vsel %vm94, %v478, 0
    %539 = vmatprep.subr.bf16.mxu0 0
    %540 = vmatpush1.bf16.msra.mxu0 %v534
    %541 = vmatprep.subr.bf16.mxu0 0
    %542 = vmatpush1.bf16.msra.mxu0 0
    %543 = vmatprep.subr.bf16.mxu0 0
    %544 = vmatpush1.bf16.msra.mxu0 0
    %545 = vmatprep.subr.bf16.mxu0 0
    %546 = vmatpush1.bf16.msra.mxu0 0
    %547 = vmatprep.subr.bf16.mxu0 0
    %548 = vmatpush1.bf16.msra.mxu0 0
    %549 = vmatprep.subr.bf16.mxu0 0
    %550 = vmatpush1.bf16.msra.mxu0 0
    %551 = vmatprep.subr.bf16.mxu0 0
    %552 = vmatpush1.bf16.msra.mxu0 0
    %553 = vmatprep.subr.bf16.mxu0 0
    %554 = vmatpush1.bf16.msra.mxu0 0
    %555 = vmatprep.subr.bf16.mxu0 0
    %556 = vmatpush1.bf16.msra.mxu0 0
    %557 = vmatprep.subr.bf16.mxu0 0
    %558 = vmatpush1.bf16.msra.mxu0 0
    %559 = vmatprep.subr.bf16.mxu0 0
    %560 = vmatpush1.bf16.msra.mxu0 0
    %561 = vmatprep.subr.bf16.mxu0 0
    %562 = vmatpush1.bf16.msra.mxu0 0
    %563 = vmatprep.subr.bf16.mxu0 0
    %564 = vmatpush1.bf16.msra.mxu0 0
    %565 = vmatprep.subr.bf16.mxu0 0
    %566 = vmatpush1.bf16.msra.mxu0 0
    %567 = vmatprep.subr.bf16.mxu0 0
    %568 = vmatpush1.bf16.msra.mxu0 0
    %569 = vmatprep.subr.bf16.mxu0 0
    %570 = vmatpush1.bf16.msra.mxu0 0
    %571 = vmatprep.mubr.bf16.mxu0 0
    %572 = vmatmul.mubr.bf16.gmra.mrb[0].mxu0 %v537
    %v573 = vpop.f32.mrb[0].mxu0
    %v574 = vadd.f32 0.0, %v573
    %v575 = vpop.f32.mrb[0].mxu0
    %v576 = vpop.f32.mrb[0].mxu0
    %v577 = vpop.f32.mrb[0].mxu0
    %578 = vdwg.mxu0
    %v583 = vunpack.c.l.b16 %v524
    %v584 = vunpack.c.l.b16 %v525
    %v585 = vunpack.c.l.b16 %v526
    %v586 = vunpack.c.l.b16 %v527
    %v587 = vpack.c.b16 %v584, %v583
    %v588 = vpack.c.b16 %v586, %v585
    %v591 = vsel %vm261, %v434, 0
    %593 = vmatprep.subr.bf16.mxu0 0
    %594 = vmatpush1.bf16.msra.mxu0 %v587
    %595 = vmatprep.subr.bf16.mxu0 0
    %596 = vmatpush1.bf16.msra.mxu0 %v588
    %597 = vmatprep.subr.bf16.mxu0 0
    %598 = vmatpush1.bf16.msra.mxu0 0
    %599 = vmatprep.subr.bf16.mxu0 0
    %600 = vmatpush1.bf16.msra.mxu0 0
    %601 = vmatprep.subr.bf16.mxu0 0
    %602 = vmatpush1.bf16.msra.mxu0 0
    %603 = vmatprep.subr.bf16.mxu0 0
    %604 = vmatpush1.bf16.msra.mxu0 0
    %605 = vmatprep.subr.bf16.mxu0 0
    %606 = vmatpush1.bf16.msra.mxu0 0
    %607 = vmatprep.subr.bf16.mxu0 0
    %608 = vmatpush1.bf16.msra.mxu0 0
    %609 = vmatprep.subr.bf16.mxu0 0
    %610 = vmatpush1.bf16.msra.mxu0 0
    %611 = vmatprep.subr.bf16.mxu0 0
    %612 = vmatpush1.bf16.msra.mxu0 0
    %613 = vmatprep.subr.bf16.mxu0 0
    %614 = vmatpush1.bf16.msra.mxu0 0
    %615 = vmatprep.subr.bf16.mxu0 0
    %616 = vmatpush1.bf16.msra.mxu0 0
    %617 = vmatprep.subr.bf16.mxu0 0
    %618 = vmatpush1.bf16.msra.mxu0 0
    %619 = vmatprep.subr.bf16.mxu0 0
    %620 = vmatpush1.bf16.msra.mxu0 0
    %621 = vmatprep.subr.bf16.mxu0 0
    %622 = vmatpush1.bf16.msra.mxu0 0
    %623 = vmatprep.subr.bf16.mxu0 0
    %624 = vmatpush1.bf16.msra.mxu0 0
    %625 = vmatprep.mubr.bf16.mxu0 0
    %626 = vmatmul.mubr.bf16.gmra.mrb[0].mxu0 %v591
    %v627 = vpop.f32.mrb[0].mxu0
    %v628 = vadd.f32 %v574, %v627
    %v629 = vpop.f32.mrb[0].mxu0
    %v630 = vpop.f32.mrb[0].mxu0
    %v631 = vpop.f32.mrb[0].mxu0
    %632 = vdwg.mxu0
    %v633 = vld [vmem:[#allocation2] sm:$0x1]
    %v635 = vlaneseq
    %v636 = vshrl.u32 %v635, 7
    %v637 = vsub.s32 0, %v636
    %v638 = vrot.slane %v633, %v637
    %v640 = vadd.f32 %v628, %v638
    %641 = vst.msk [vmem:[%s16] sm:$0xff] %vm261, %v640
    %v642 = vld [vmem:[#allocation4] sm:$0xf]
    %v643 = vld [vmem:[#allocation4 + $0x4] sm:$0xf]
    %v644 = vld [vmem:[%s14] sm:$0xf]
    %v645 = vld [vmem:[%s14 + $0x4] sm:$0xf]
    %v646 = vld [vmem:[%s14 + $0x8] sm:$0xf]
    %v647 = vld [vmem:[%s14 + $0xc] sm:$0xf]
    %v652 = vunpack.c.l.b16 %v644
    %v653 = vunpack.c.l.b16 %v645
    %v654 = vunpack.c.l.b16 %v646
    %v655 = vunpack.c.l.b16 %v647
    %v656 = vpack.c.b16 %v653, %v652
    %v657 = vpack.c.b16 %v655, %v654
    %v661 = vsel %vm261, %v523, 0
    %663 = vmatprep.subr.bf16.mxu0 0
    %664 = vmatpush1.bf16.msra.mxu0 %v656
    %665 = vmatprep.subr.bf16.mxu0 0
    %666 = vmatpush1.bf16.msra.mxu0 %v657
    %667 = vmatprep.subr.bf16.mxu0 0
    %668 = vmatpush1.bf16.msra.mxu0 0
    %669 = vmatprep.subr.bf16.mxu0 0
    %670 = vmatpush1.bf16.msra.mxu0 0
    %671 = vmatprep.subr.bf16.mxu0 0
    %672 = vmatpush1.bf16.msra.mxu0 0
    %673 = vmatprep.subr.bf16.mxu0 0
    %674 = vmatpush1.bf16.msra.mxu0 0
    %675 = vmatprep.subr.bf16.mxu0 0
    %676 = vmatpush1.bf16.msra.mxu0 0
    %677 = vmatprep.subr.bf16.mxu0 0
    %678 = vmatpush1.bf16.msra.mxu0 0
    %679 = vmatprep.subr.bf16.mxu0 0
    %680 = vmatpush1.bf16.msra.mxu0 0
    %681 = vmatprep.subr.bf16.mxu0 0
    %682 = vmatpush1.bf16.msra.mxu0 0
    %683 = vmatprep.subr.bf16.mxu0 0
    %684 = vmatpush1.bf16.msra.mxu0 0
    %685 = vmatprep.subr.bf16.mxu0 0
    %686 = vmatpush1.bf16.msra.mxu0 0
    %687 = vmatprep.subr.bf16.mxu0 0
    %688 = vmatpush1.bf16.msra.mxu0 0
    %689 = vmatprep.subr.bf16.mxu0 0
    %690 = vmatpush1.bf16.msra.mxu0 0
    %691 = vmatprep.subr.bf16.mxu0 0
    %692 = vmatpush1.bf16.msra.mxu0 0
    %693 = vmatprep.subr.bf16.mxu0 0
    %694 = vmatpush1.bf16.msra.mxu0 0
    %695 = vmatprep.mubr.bf16.mxu0 0
    %696 = vmatmul.mubr.bf16.gmra.mrb[0].mxu0 %v661
    %v697 = vpop.f32.mrb[0].mxu0
    %v698 = vadd.f32 0.0, %v697
    %v699 = vpop.f32.mrb[0].mxu0
    %v700 = vpop.f32.mrb[0].mxu0
    %v701 = vadd.f32 0.0, %v700
    %v702 = vpop.f32.mrb[0].mxu0
    %703 = vdwg.mxu0
    %v706 = vunpack.c.l.b16 %v642
    %v707 = vunpack.c.l.b16 %v643
    %v708 = vpack.c.b16 %v707, %v706
    %v711 = vsel %vm94, %v437, 0
    %713 = vmatprep.subr.bf16.mxu0 0
    %714 = vmatpush1.bf16.msra.mxu0 %v708
    %715 = vmatprep.subr.bf16.mxu0 0
    %716 = vmatpush1.bf16.msra.mxu0 0
    %717 = vmatprep.subr.bf16.mxu0 0
    %718 = vmatpush1.bf16.msra.mxu0 0
    %719 = vmatprep.subr.bf16.mxu0 0
    %720 = vmatpush1.bf16.msra.mxu0 0
    %721 = vmatprep.subr.bf16.mxu0 0
    %722 = vmatpush1.bf16.msra.mxu0 0
    %723 = vmatprep.subr.bf16.mxu0 0
    %724 = vmatpush1.bf16.msra.mxu0 0
    %725 = vmatprep.subr.bf16.mxu0 0
    %726 = vmatpush1.bf16.msra.mxu0 0
    %727 = vmatprep.subr.bf16.mxu0 0
    %728 = vmatpush1.bf16.msra.mxu0 0
    %729 = vmatprep.subr.bf16.mxu0 0
    %730 = vmatpush1.bf16.msra.mxu0 0
    %731 = vmatprep.subr.bf16.mxu0 0
    %732 = vmatpush1.bf16.msra.mxu0 0
    %733 = vmatprep.subr.bf16.mxu0 0
    %734 = vmatpush1.bf16.msra.mxu0 0
    %735 = vmatprep.subr.bf16.mxu0 0
    %736 = vmatpush1.bf16.msra.mxu0 0
    %737 = vmatprep.subr.bf16.mxu0 0
    %738 = vmatpush1.bf16.msra.mxu0 0
    %739 = vmatprep.subr.bf16.mxu0 0
    %740 = vmatpush1.bf16.msra.mxu0 0
    %741 = vmatprep.subr.bf16.mxu0 0
    %742 = vmatpush1.bf16.msra.mxu0 0
    %743 = vmatprep.subr.bf16.mxu0 0
    %744 = vmatpush1.bf16.msra.mxu0 0
    %745 = vmatprep.mubr.bf16.mxu0 0
    %746 = vmatmul.mubr.bf16.gmra.mrb[0].mxu0 %v711
    %v747 = vpop.f32.mrb[0].mxu0
    %v748 = vadd.f32 %v698, %v747
    %v749 = vpop.f32.mrb[0].mxu0
    %v750 = vpop.f32.mrb[0].mxu0
    %v751 = vadd.f32 %v701, %v750
    %v752 = vpop.f32.mrb[0].mxu0
    %753 = vdwg.mxu0
    %v754 = vld [vmem:[%s15] sm:$0x1]
    %v756 = vlaneseq
    %v757 = vshrl.u32 %v756, 7
    %v758 = vsub.s32 0, %v757
    %v759 = vrot.slane %v754, %v758
    %v761 = vadd.f32 %v748, %v759
    %v762 = vadd.f32 %v751, %v759
    %763 = vst.msk [vmem:[%s17] sm:$0xff] %vm94, %v761
    %764 = vst.msk [vmem:[%s17 + $0x8] sm:$0xff] %vm94, %v762
    // Predicated region
    $region74: #{graphsage_forward.2} parent=1 // pred_check
      _
    $region75: #{graphsage_forward.2} parent=1 // pred_check_branch
      %766 = sbr.rel (0) target = $region77
    $region76: #{graphsage_forward.2} parent=1 // pred_region
      _
    $region77: #{graphsage_forward.2} parent=1 // pred_fallthru
      _
    // Predicated region
    $region78: #{graphsage_forward.2} parent=1 // pred_check
      _
    $region79: #{graphsage_forward.2} parent=1 // pred_check_branch
      %768 = sbr.rel (0) target = $region81
    $region80: #{graphsage_forward.2} parent=1 // pred_region
      _
    $region81: #{graphsage_forward.2} parent=1 // pred_fallthru
      _
    // Predicated region
    $region82: #{graphsage_forward.2} parent=1 // pred_check
      _
    $region83: #{graphsage_forward.2} parent=1 // pred_check_branch
      %770 = sbr.rel (0) target = $region85
    $region84: #{graphsage_forward.2} parent=1 // pred_region
      _
    $region85: #{graphsage_forward.2} parent=1 // pred_fallthru
      _
    // Predicated region
    $region86: #{graphsage_forward.2} parent=1 // pred_check
      _
    $region87: #{graphsage_forward.2} parent=1 // pred_check_branch
      %772 = sbr.rel (0) target = $region89
    $region88: #{graphsage_forward.2} parent=1 // pred_region
      _
    $region89: #{graphsage_forward.2} parent=1 // pred_fallthru
      _
    %773 = vsyncpa [#allocation3], 1
    %774 = vsyncpa [#allocation5], 1

// kernel: graphsage_forward.3
$region0: #{graphsage_forward.3}
  #allocation0 [shape = 'u32[]', space=smem, size = 0x4, offset = 0x4, fixed_abs, tag = 'smem constant byte address 0x4 - core index']
  #allocation1 [shape = 'u32[144,128]{1,0:T(1,128)}', space=vmem, size = 0x12000, scoped, tag = 'internal scratch']
  #allocation2 [shape = 'f32[8,32]{1,0:T(8,128)}', space=vmem, size = 0x1000, scoped, tag = 'scratch operand']
  #allocation3 [shape = 'f32[8,16]{1,0:T(8,128)}', space=vmem, size = 0x1000, scoped, tag = 'scratch operand']
  #allocation4 [shape = 's32[1]{0}', space=sflag, size = 0x4, scoped, tag = 'scoped memory for graphsage_forward.3']
  #allocation5 [shape = 'u8[512]{0}', space=smem, size = 0x200, scoped, tag = 'prefetched SMEM operand 0']
  #allocation6 [shape = 'u8[512]{0}', space=smem, size = 0x200, scoped, tag = 'prefetched SMEM operand 1']
  %s0 = inlined_call_operand.vmem [shape: s32[24], index: 0, kind: input, shape index: {}]
  %s1 = inlined_call_operand.vmem [shape: s32[24], index: 1, kind: input, shape index: {}]
  %s2 = inlined_call_operand.vmem [shape: f32[8,32], index: 2, kind: input, shape index: {}]
  %s3 = inlined_call_operand.vmem [shape: f32[16,16], index: 3, kind: input, shape index: {}]
  %s4 = inlined_call_operand.vmem [shape: bf16[32,128], index: 4, kind: input, shape index: {}]
  %s5 = inlined_call_operand.vmem [shape: bf16[16,128], index: 5, kind: input, shape index: {}]
  %s6 = inlined_call_operand.vmem [shape: f32[1,128], index: 6, kind: input, shape index: {}]
  %s7 = inlined_call_operand.vmem [shape: f32[24,128], index: 7, kind: output, shape index: {}]
  %s8 = sld [smem:[#allocation0]]
  $region53: #{graphsage_forward.3} parent=0
    _
  %s10 = ssub.s32 1, %s8
  %s11 = scalar_select 0, %s10, %s8
  %s12 = sshll.u32 %s0, 4
  %s13 = int_to_ptr.vmem [resolvable:$true] %s12
  %15 = dma.vmem_to_smem %s13, 16, [#allocation5], [#allocation4]
  %s16 = sshll.u32 %s1, 4
  %s17 = int_to_ptr.vmem [resolvable:$true] %s16
  %19 = dma.vmem_to_smem %s17, 16, [#allocation6], [#allocation4]
  %20 = dma.done [#allocation4], 32
  %21 = sfence
  loop: start=0, step=1, limit=5
  $region2: #{graphsage_forward.3} parent=0 // loop_pre_header
    _
  $region3: #{graphsage_forward.3} parent=0 // loop_header
    %s23 = sphi 0, %s27
    %p24 = scmp.ge.s32.totalorder %s23, 5
    %s31 = sphi 0, %s31
    %s33 = sphi 0, %s31
    %s34 = sphi 0, %s33
    %s48 = sphi 0, %s34
    %s52 = sphi 0, %s52
    %s54 = sphi 0, %s52
    %s55 = sphi 0, %s54
    %s69 = sphi 0, %s55
    %s73 = sphi 0, %s73
    %s75 = sphi 0, %s73
    %s76 = sphi 0, %s75
    %s90 = sphi 0, %s76
    %s94 = sphi 0, %s94
    %s96 = sphi 0, %s94
    %s97 = sphi 0, %s96
    %s111 = sphi 0, %s97
    %s115 = sphi 0, %s115
    %s117 = sphi 0, %s115
    %s118 = sphi 0, %s117
    %s132 = sphi 0, %s118
    %s138 = sphi 0, %s140
    %s141 = sphi 0, %s138
    %s142 = sphi 0, %s141
    %s158 = sphi 0, %s142
  $region4: #{graphsage_forward.3} parent=0 // loop_header_branch
    %26 = sbr.rel (%p24) target = $region8
  $region5: #{graphsage_forward.3} parent=0 // loop_body
    %s28 = ssub.s32 %s23, 1
    %s29 = ssub.s32 %s23, 2
    %s30 = sadd.s32 %s23, 1
    %s32 = sadd.s32 %s31, 1
    %p35 = scmp.eq.s32.totalorder %s23, 2
    %p36 = scmp.ne.s32.totalorder %s31, %s33
    %p37 = scmp.eq.s32.totalorder %s23, 0
    %p38 = por %p36, %p37
    %p39 = scmp.ne.s32.totalorder %s31, %s33
    %p40 = scmp.eq.s32.totalorder %s28, 2
    %p41 = por %p39, %p40
    %p42 = scmp.ne.s32.totalorder %s33, %s34
    %p43 = scmp.eq.s32.totalorder %s28, 0
    %p44 = por %p42, %p43
    %p45 = scmp.ne.s32.totalorder %s33, %s34
    %p46 = scmp.eq.s32.totalorder %s29, 2
    %p47 = por %p45, %p46
    %p49 = scmp.ne.s32.totalorder %s34, %s48
    %p50 = scmp.eq.s32.totalorder %s29, 0
    %p51 = por %p49, %p50
    %s53 = sadd.s32 %s52, 1
    %p56 = scmp.eq.s32.totalorder %s23, 2
    %p57 = scmp.ne.s32.totalorder %s52, %s54
    %p58 = scmp.eq.s32.totalorder %s23, 0
    %p59 = por %p57, %p58
    %p60 = scmp.ne.s32.totalorder %s52, %s54
    %p61 = scmp.eq.s32.totalorder %s28, 2
    %p62 = por %p60, %p61
    %p63 = scmp.ne.s32.totalorder %s54, %s55
    %p64 = scmp.eq.s32.totalorder %s28, 0
    %p65 = por %p63, %p64
    %p66 = scmp.ne.s32.totalorder %s54, %s55
    %p67 = scmp.eq.s32.totalorder %s29, 2
    %p68 = por %p66, %p67
    %p70 = scmp.ne.s32.totalorder %s55, %s69
    %p71 = scmp.eq.s32.totalorder %s29, 0
    %p72 = por %p70, %p71
    %s74 = sadd.s32 %s73, 1
    %p77 = scmp.eq.s32.totalorder %s23, 2
    %p78 = scmp.ne.s32.totalorder %s73, %s75
    %p79 = scmp.eq.s32.totalorder %s23, 0
    %p80 = por %p78, %p79
    %p81 = scmp.ne.s32.totalorder %s73, %s75
    %p82 = scmp.eq.s32.totalorder %s28, 2
    %p83 = por %p81, %p82
    %p84 = scmp.ne.s32.totalorder %s75, %s76
    %p85 = scmp.eq.s32.totalorder %s28, 0
    %p86 = por %p84, %p85
    %p87 = scmp.ne.s32.totalorder %s75, %s76
    %p88 = scmp.eq.s32.totalorder %s29, 2
    %p89 = por %p87, %p88
    %p91 = scmp.ne.s32.totalorder %s76, %s90
    %p92 = scmp.eq.s32.totalorder %s29, 0
    %p93 = por %p91, %p92
    %s95 = sadd.s32 %s94, 1
    %p98 = scmp.eq.s32.totalorder %s23, 2
    %p99 = scmp.ne.s32.totalorder %s94, %s96
    %p100 = scmp.eq.s32.totalorder %s23, 0
    %p101 = por %p99, %p100
    %p102 = scmp.ne.s32.totalorder %s94, %s96
    %p103 = scmp.eq.s32.totalorder %s28, 2
    %p104 = por %p102, %p103
    %p105 = scmp.ne.s32.totalorder %s96, %s97
    %p106 = scmp.eq.s32.totalorder %s28, 0
    %p107 = por %p105, %p106
    %p108 = scmp.ne.s32.totalorder %s96, %s97
    %p109 = scmp.eq.s32.totalorder %s29, 2
    %p110 = por %p108, %p109
    %p112 = scmp.ne.s32.totalorder %s97, %s111
    %p113 = scmp.eq.s32.totalorder %s29, 0
    %p114 = por %p112, %p113
    %s116 = sadd.s32 %s115, 1
    %p119 = scmp.eq.s32.totalorder %s23, 2
    %p120 = scmp.ne.s32.totalorder %s115, %s117
    %p121 = scmp.eq.s32.totalorder %s23, 0
    %p122 = por %p120, %p121
    %p123 = scmp.ne.s32.totalorder %s115, %s117
    %p124 = scmp.eq.s32.totalorder %s28, 2
    %p125 = por %p123, %p124
    %p126 = scmp.ne.s32.totalorder %s117, %s118
    %p127 = scmp.eq.s32.totalorder %s28, 0
    %p128 = por %p126, %p127
    %p129 = scmp.ne.s32.totalorder %s117, %s118
    %p130 = scmp.eq.s32.totalorder %s29, 2
    %p131 = por %p129, %p130
    %p133 = scmp.ne.s32.totalorder %s118, %s132
    %p134 = scmp.eq.s32.totalorder %s29, 0
    %p135 = por %p133, %p134
    %s136 = ssub.s32 %s23, %s30
    %p137 = scmp.eq.s32.totalorder %s136, 0
    %s139 = sadd.s32 %s138, 1
    %s140 = scalar_select %p137, %s138, %s139
    %p143 = pneg %p137
    %p144 = scmp.eq.s32.totalorder %s23, 2
    %p145 = por %p143, %p144
    %p146 = scmp.ne.s32.totalorder %s138, %s141
    %p147 = scmp.eq.s32.totalorder %s23, 0
    %p148 = por %p146, %p147
    %p149 = scmp.ne.s32.totalorder %s138, %s141
    %p150 = scmp.eq.s32.totalorder %s28, 2
    %p151 = por %p149, %p150
    %p152 = scmp.ne.s32.totalorder %s141, %s142
    %p153 = scmp.eq.s32.totalorder %s28, 0
    %p154 = por %p152, %p153
    %p155 = scmp.ne.s32.totalorder %s141, %s142
    %p156 = scmp.eq.s32.totalorder %s29, 2
    %p157 = por %p155, %p156
    %p159 = scmp.ne.s32.totalorder %s142, %s158
    %p160 = scmp.eq.s32.totalorder %s29, 0
    %p161 = por %p159, %p160
    %p162 = scmp.le.s32.totalorder 1, %s23
    %p163 = scmp.lt.s32.totalorder %s23, 4
    %p164 = pnand %p162, %p163
    %p165 = pneg %p164
    // Predicated region
    $region9: #{graphsage_forward.3} parent=5 // pred_check
      _
    $region10: #{graphsage_forward.3} parent=5 // pred_check_branch
      %167 = sbr.rel (%p164) target = $region12
    $region11: #{graphsage_forward.3} parent=5 // pred_region
      %s168 = ssub.s32 %s23, 1
      // Predicated region
      $region13: #{graphsage_forward.3} parent=11 // pred_check
        %p169 = pneg %p44
      $region14: #{graphsage_forward.3} parent=11 // pred_check_branch
        %171 = sbr.rel (%p169) target = $region16
      $region15: #{graphsage_forward.3} parent=11 // pred_region
        _
      $region16: #{graphsage_forward.3} parent=11 // pred_fallthru
        _
      // Predicated region
      $region17: #{graphsage_forward.3} parent=11 // pred_check
        %p172 = pneg %p65
      $region18: #{graphsage_forward.3} parent=11 // pred_check_branch
        %174 = sbr.rel (%p172) target = $region20
      $region19: #{graphsage_forward.3} parent=11 // pred_region
        _
      $region20: #{graphsage_forward.3} parent=11 // pred_fallthru
        _
      // Predicated region
      $region21: #{graphsage_forward.3} parent=11 // pred_check
        %p175 = pneg %p86
      $region22: #{graphsage_forward.3} parent=11 // pred_check_branch
        %177 = sbr.rel (%p175) target = $region24
      $region23: #{graphsage_forward.3} parent=11 // pred_region
        _
      $region24: #{graphsage_forward.3} parent=11 // pred_fallthru
        _
      // Predicated region
      $region25: #{graphsage_forward.3} parent=11 // pred_check
        %p178 = pneg %p107
      $region26: #{graphsage_forward.3} parent=11 // pred_check_branch
        %180 = sbr.rel (%p178) target = $region28
      $region27: #{graphsage_forward.3} parent=11 // pred_region
        _
      $region28: #{graphsage_forward.3} parent=11 // pred_fallthru
        _
      // Predicated region
      $region29: #{graphsage_forward.3} parent=11 // pred_check
        %p181 = pneg %p128
      $region30: #{graphsage_forward.3} parent=11 // pred_check_branch
        %183 = sbr.rel (%p181) target = $region32
      $region31: #{graphsage_forward.3} parent=11 // pred_region
        _
      $region32: #{graphsage_forward.3} parent=11 // pred_fallthru
        _
    $region12: #{graphsage_forward.3} parent=5 // pred_fallthru
      _
    %p184 = scmp.lt.s32.totalorder %s23, 3
    // Predicated region
    $region33: #{graphsage_forward.3} parent=5 // pred_check
      %p185 = pneg %p184
    $region34: #{graphsage_forward.3} parent=5 // pred_check_branch
      %187 = sbr.rel (%p185) target = $region36
    $region35: #{graphsage_forward.3} parent=5 // pred_region
      _
    $region36: #{graphsage_forward.3} parent=5 // pred_fallthru
      _
    %p188 = scmp.le.s32.totalorder 1, %s23
    %p189 = scmp.lt.s32.totalorder %s23, 4
    %p190 = pnand %p188, %p189
    %p191 = pneg %p190
    // Predicated region
    $region37: #{graphsage_forward.3} parent=5 // pred_check
      _
    $region38: #{graphsage_forward.3} parent=5 // pred_check_branch
      %193 = sbr.rel (%p190) target = $region40
    $region39: #{graphsage_forward.3} parent=5 // pred_region
      %s194 = ssub.s32 %s23, 1
      %p195 = pneg %p44
      %p196 = pneg %p41
      %p197 = pneg %p65
      %p198 = pneg %p62
      %p199 = pneg %p86
      %p200 = pneg %p83
      %p201 = pneg %p107
      %p202 = pneg %p104
      %p203 = pneg %p128
      %p204 = pneg %p125
      %p205 = pneg %p154
      %p206 = pneg %p151
      %p207 = scmp.lt.s32.totalorder %s28, 2
      %s208 = scalar_select %p207, %s28, 2
      %s209 = smul.addr %s208, 8
      %s210 = scalar_lea.vmem %s7, %s209
      %p211 = scmp.lt.s32.totalorder %s28, 2
      %s212 = scalar_select %p211, %s28, 2
      %s213 = smul.addr %s212, 8
      %s214 = scalar_lea.vmem %s7, %s213
      %s216 = smul.u32 %s28, 8
      %s217 = sld [smem:[#allocation5 + %s216]]
      %s218 = sld [smem:[#allocation6 + %s216]]
      %s219 = scalar_lea.vmem %s2, %s217
      %v220 = vld [vmem:[%s219] sm:$0x1]
      %vm221 = vcmask 253952
      %222 = vst.msk [vmem:[#allocation2] sm:$0x1] %vm221, %v220
      %s223 = scalar_lea.vmem %s3, %s218
      %v224 = vld [vmem:[%s223] sm:$0x1]
      %vm225 = vcmask 122880
      %226 = vst.msk [vmem:[#allocation3] sm:$0x1] %vm225, %v224
      %s227 = sadd.s32 %s216, 1
      %s228 = sld [smem:[#allocation5 + %s227]]
      %s229 = sld [smem:[#allocation6 + %s227]]
      %s230 = scalar_lea.vmem %s2, %s228
      %v231 = vld [vmem:[%s230] sm:$0x1]
      %232 = vst.msk [vmem:[#allocation2 + $0x1] sm:$0x1] %vm221, %v231
      %s233 = scalar_lea.vmem %s3, %s229
      %v234 = vld [vmem:[%s233] sm:$0x1]
      %235 = vst.msk [vmem:[#allocation3 + $0x1] sm:$0x1] %vm225, %v234
      %s236 = sadd.s32 %s216, 2
      %s237 = sld [smem:[#allocation5 + %s236]]
      %s238 = sld [smem:[#allocation6 + %s236]]
      %s239 = scalar_lea.vmem %s2, %s237
      %v240 = vld [vmem:[%s239] sm:$0x1]
      %241 = vst.msk [vmem:[#allocation2 + $0x2] sm:$0x1] %vm221, %v240
      %s242 = scalar_lea.vmem %s3, %s238
      %v243 = vld [vmem:[%s242] sm:$0x1]
      %244 = vst.msk [vmem:[#allocation3 + $0x2] sm:$0x1] %vm225, %v243
      %s245 = sadd.s32 %s216, 3
      %s246 = sld [smem:[#allocation5 + %s245]]
      %s247 = sld [smem:[#allocation6 + %s245]]
      %s248 = scalar_lea.vmem %s2, %s246
      %v249 = vld [vmem:[%s248] sm:$0x1]
      %250 = vst.msk [vmem:[#allocation2 + $0x3] sm:$0x1] %vm221, %v249
      %s251 = scalar_lea.vmem %s3, %s247
      %v252 = vld [vmem:[%s251] sm:$0x1]
      %253 = vst.msk [vmem:[#allocation3 + $0x3] sm:$0x1] %vm225, %v252
      %s254 = sadd.s32 %s216, 4
      %s255 = sld [smem:[#allocation5 + %s254]]
      %s256 = sld [smem:[#allocation6 + %s254]]
      %s257 = scalar_lea.vmem %s2, %s255
      %v258 = vld [vmem:[%s257] sm:$0x1]
      %259 = vst.msk [vmem:[#allocation2 + $0x4] sm:$0x1] %vm221, %v258
      %s260 = scalar_lea.vmem %s3, %s256
      %v261 = vld [vmem:[%s260] sm:$0x1]
      %262 = vst.msk [vmem:[#allocation3 + $0x4] sm:$0x1] %vm225, %v261
      %s263 = sadd.s32 %s216, 5
      %s264 = sld [smem:[#allocation5 + %s263]]
      %s265 = sld [smem:[#allocation6 + %s263]]
      %s266 = scalar_lea.vmem %s2, %s264
      %v267 = vld [vmem:[%s266] sm:$0x1]
      %268 = vst.msk [vmem:[#allocation2 + $0x5] sm:$0x1] %vm221, %v267
      %s269 = scalar_lea.vmem %s3, %s265
      %v270 = vld [vmem:[%s269] sm:$0x1]
      %271 = vst.msk [vmem:[#allocation3 + $0x5] sm:$0x1] %vm225, %v270
      %s272 = sadd.s32 %s216, 6
      %s273 = sld [smem:[#allocation5 + %s272]]
      %s274 = sld [smem:[#allocation6 + %s272]]
      %s275 = scalar_lea.vmem %s2, %s273
      %v276 = vld [vmem:[%s275] sm:$0x1]
      %277 = vst.msk [vmem:[#allocation2 + $0x6] sm:$0x1] %vm221, %v276
      %s278 = scalar_lea.vmem %s3, %s274
      %v279 = vld [vmem:[%s278] sm:$0x1]
      %280 = vst.msk [vmem:[#allocation3 + $0x6] sm:$0x1] %vm225, %v279
      %s281 = sadd.s32 %s216, 7
      %s282 = sld [smem:[#allocation5 + %s281]]
      %s283 = sld [smem:[#allocation6 + %s281]]
      %s284 = scalar_lea.vmem %s2, %s282
      %v285 = vld [vmem:[%s284] sm:$0x1]
      %286 = vst.msk [vmem:[#allocation2 + $0x7] sm:$0x1] %vm221, %v285
      %s287 = scalar_lea.vmem %s3, %s283
      %v288 = vld [vmem:[%s287] sm:$0x1]
      %289 = vst.msk [vmem:[#allocation3 + $0x7] sm:$0x1] %vm225, %v288
      %v290 = vld [vmem:[#allocation2] sm:$0xff]
      %v291 = vpack.c.bf16 %v290, %v290
      %v292 = vld [vmem:[#allocation3] sm:$0xff]
      %v293 = vpack.c.bf16 %v292, %v292
      %v294 = vld [vmem:[%s4] sm:$0xf]
      %v295 = vld [vmem:[%s4 + $0x4] sm:$0xf]
      %v296 = vld [vmem:[%s4 + $0x8] sm:$0xf]
      %v297 = vld [vmem:[%s4 + $0xc] sm:$0xf]
      %v298 = vld [vmem:[%s5] sm:$0xf]
      %v299 = vld [vmem:[%s5 + $0x4] sm:$0xf]
      %v302 = vunpack.c.l.b16 %v298
      %v303 = vunpack.c.l.b16 %v299
      %v304 = vpack.c.b16 %v303, %v302
      %vm306 = vcmask 130048
      %v308 = vsel %vm306, %v293, 0
      %310 = vmatprep.subr.bf16.mxu0 0
      %311 = vmatpush1.bf16.msra.mxu0 %v304
      %312 = vmatprep.subr.bf16.mxu0 0
      %313 = vmatpush1.bf16.msra.mxu0 0
      %314 = vmatprep.subr.bf16.mxu0 0
      %315 = vmatpush1.bf16.msra.mxu0 0
      %316 = vmatprep.subr.bf16.mxu0 0
      %317 = vmatpush1.bf16.msra.mxu0 0
      %318 = vmatprep.subr.bf16.mxu0 0
      %319 = vmatpush1.bf16.msra.mxu0 0
      %320 = vmatprep.subr.bf16.mxu0 0
      %321 = vmatpush1.bf16.msra.mxu0 0
      %322 = vmatprep.subr.bf16.mxu0 0
      %323 = vmatpush1.bf16.msra.mxu0 0
      %324 = vmatprep.subr.bf16.mxu0 0
      %325 = vmatpush1.bf16.msra.mxu0 0
      %326 = vmatprep.subr.bf16.mxu0 0
      %327 = vmatpush1.bf16.msra.mxu0 0
      %328 = vmatprep.subr.bf16.mxu0 0
      %329 = vmatpush1.bf16.msra.mxu0 0
      %330 = vmatprep.subr.bf16.mxu0 0
      %331 = vmatpush1.bf16.msra.mxu0 0
      %332 = vmatprep.subr.bf16.mxu0 0
      %333 = vmatpush1.bf16.msra.mxu0 0
      %334 = vmatprep.subr.bf16.mxu0 0
      %335 = vmatpush1.bf16.msra.mxu0 0
      %336 = vmatprep.subr.bf16.mxu0 0
      %337 = vmatpush1.bf16.msra.mxu0 0
      %338 = vmatprep.subr.bf16.mxu0 0
      %339 = vmatpush1.bf16.msra.mxu0 0
      %340 = vmatprep.subr.bf16.mxu0 0
      %341 = vmatpush1.bf16.msra.mxu0 0
      %342 = vmatprep.mubr.bf16.mxu0 0
      %343 = vmatmul.mubr.bf16.gmra.mrb[0].mxu0 %v308
      %v344 = vpop.f32.mrb[0].mxu0
      %v345 = vadd.f32 0.0, %v344
      %v346 = vpop.f32.mrb[0].mxu0
      %v347 = vpop.f32.mrb[0].mxu0
      %v348 = vpop.f32.mrb[0].mxu0
      %349 = vdwg.mxu0
      %v354 = vunpack.c.l.b16 %v294
      %v355 = vunpack.c.l.b16 %v295
      %v356 = vunpack.c.l.b16 %v296
      %v357 = vunpack.c.l.b16 %v297
      %v358 = vpack.c.b16 %v355, %v354
      %v359 = vpack.c.b16 %v357, %v356
      %vm362 = vcmask 261120
      %v364 = vsel %vm362, %v291, 0
      %366 = vmatprep.subr.bf16.mxu0 0
      %367 = vmatpush1.bf16.msra.mxu0 %v358
      %368 = vmatprep.subr.bf16.mxu0 0
      %369 = vmatpush1.bf16.msra.mxu0 %v359
      %370 = vmatprep.subr.bf16.mxu0 0
      %371 = vmatpush1.bf16.msra.mxu0 0
      %372 = vmatprep.subr.bf16.mxu0 0
      %373 = vmatpush1.bf16.msra.mxu0 0
      %374 = vmatprep.subr.bf16.mxu0 0
      %375 = vmatpush1.bf16.msra.mxu0 0
      %376 = vmatprep.subr.bf16.mxu0 0
      %377 = vmatpush1.bf16.msra.mxu0 0
      %378 = vmatprep.subr.bf16.mxu0 0
      %379 = vmatpush1.bf16.msra.mxu0 0
      %380 = vmatprep.subr.bf16.mxu0 0
      %381 = vmatpush1.bf16.msra.mxu0 0
      %382 = vmatprep.subr.bf16.mxu0 0
      %383 = vmatpush1.bf16.msra.mxu0 0
      %384 = vmatprep.subr.bf16.mxu0 0
      %385 = vmatpush1.bf16.msra.mxu0 0
      %386 = vmatprep.subr.bf16.mxu0 0
      %387 = vmatpush1.bf16.msra.mxu0 0
      %388 = vmatprep.subr.bf16.mxu0 0
      %389 = vmatpush1.bf16.msra.mxu0 0
      %390 = vmatprep.subr.bf16.mxu0 0
      %391 = vmatpush1.bf16.msra.mxu0 0
      %392 = vmatprep.subr.bf16.mxu0 0
      %393 = vmatpush1.bf16.msra.mxu0 0
      %394 = vmatprep.subr.bf16.mxu0 0
      %395 = vmatpush1.bf16.msra.mxu0 0
      %396 = vmatprep.subr.bf16.mxu0 0
      %397 = vmatpush1.bf16.msra.mxu0 0
      %398 = vmatprep.mubr.bf16.mxu0 0
      %399 = vmatmul.mubr.bf16.gmra.mrb[0].mxu0 %v364
      %v400 = vpop.f32.mrb[0].mxu0
      %v401 = vadd.f32 %v345, %v400
      %v402 = vpop.f32.mrb[0].mxu0
      %v403 = vpop.f32.mrb[0].mxu0
      %v404 = vpop.f32.mrb[0].mxu0
      %405 = vdwg.mxu0
      %v406 = vld [vmem:[%s6] sm:$0x1]
      %v408 = vlaneseq
      %v409 = vshrl.u32 %v408, 7
      %v410 = vsub.s32 0, %v409
      %v411 = vrot.slane %v406, %v410
      %v413 = vadd.f32 %v401, %v411
      %v414 = vlaneseq
      %v415 = vand.u32 %v414, 127
      %vm416 = vcmp.lt.s32.totalorder %v415, 2
      %v417 = vsel %vm416, %v413, -1e+30
      %418 = vmax.xlane.f32.xlu0 %v417
      %v419 = vpop.xlane.xlu0 %418
      %v420 = vsub.f32 %v417, %v419
      %v421 = vmul.f32 %v420, 1.442695
      %v422 = vpow.pop %v421
      %423 = vadd.xlane.f32.xlu0 %v422
      %v424 = vpop.xlane.xlu0 %423
      %v425 = vrcp.pop %v424
      %v426 = vmul.f32 %v422, %v425
      %427 = vst [vmem:[%s214] sm:$0xff] %v426
      %p428 = scmp.lt.s32.totalorder %s28, 2
      %s429 = scalar_select %p428, %s28, 2
      %s430 = smul.addr %s429, 8
      %s431 = scalar_lea.vmem %s7, %s430
      // Predicated region
      $region41: #{graphsage_forward.3} parent=39 // pred_check
        %p432 = pneg %p151
      $region42: #{graphsage_forward.3} parent=39 // pred_check_branch
        %434 = sbr.rel (%p432) target = $region44
      $region43: #{graphsage_forward.3} parent=39 // pred_region
        _
      $region44: #{graphsage_forward.3} parent=39 // pred_fallthru
        _
    $region40: #{graphsage_forward.3} parent=5 // pred_fallthru
      _
    %p435 = scmp.le.s32.totalorder 2, %s23
    // Predicated region
    $region45: #{graphsage_forward.3} parent=5 // pred_check
      %p436 = pneg %p435
    $region46: #{graphsage_forward.3} parent=5 // pred_check_branch
      %438 = sbr.rel (%p436) target = $region48
    $region47: #{graphsage_forward.3} parent=5 // pred_region
      %s439 = ssub.s32 %s23, 2
      // Predicated region
      $region49: #{graphsage_forward.3} parent=47 // pred_check
        %p440 = pneg %p157
      $region50: #{graphsage_forward.3} parent=47 // pred_check_branch
        %442 = sbr.rel (%p440) target = $region52
      $region51: #{graphsage_forward.3} parent=47 // pred_region
        %p443 = scmp.lt.s32.totalorder %s29, 2
        %s444 = scalar_select %p443, %s29, 2
        %s445 = smul.addr %s444, 8
        %s446 = scalar_lea.vmem %s7, %s445
      $region52: #{graphsage_forward.3} parent=47 // pred_fallthru
        _
    $region48: #{graphsage_forward.3} parent=5 // pred_fallthru
      _
  $region6: #{graphsage_forward.3} parent=0 // loop_footer
    %s27 = sadd.s32 1, %s23
  $region7: #{graphsage_forward.3} parent=0 // loop_footer_branch
    %22 = sbr.rel target = $region3
  $region8: #{graphsage_forward.3} parent=0 // loop_exit
    _

</llo_original>
